<compile_context>
chip_gen: v7x
topology: tpu7x:2x2x1
jax: 0.10.0
libtpu: 0.0.40
codegen_flags: <defaults>
</compile_context>

<pallas_src>
import jax
import jax.numpy as jnp
from jax.experimental import pallas as pl
from jax.experimental.pallas import tpu as pltpu


def mlp_kernel(x_ref, w1_ref, b1_ref, w2r_ref, b2_ref, o_ref):
    # fc1 on the MXU with f32 accumulation; Hp=128 keeps the hidden dim lane-dense.
    h = jnp.dot(x_ref[...], w1_ref[...], preferred_element_type=jnp.float32)
    h = jnp.maximum(h + b1_ref[...], 0.0)                  # (bt, Hp) + (1, Hp), ReLU
    # TODO(synk): torch.nn.Dropout(p=0.6) is identity in eval mode; training-mode
    # stochastic masking (Bernoulli + 1/(1-p) scale) is intentionally not implemented.
    # fc2 with a single output column: VPU multiply + lane reduction (no 2nd MXU pass).
    y = jnp.sum(h * w2r_ref[...], axis=-1, keepdims=True) + b2_ref[0]   # (bt, 1)
    o_ref[...] = jax.nn.sigmoid(y).astype(o_ref.dtype)


def mlp_forward(x, w1p, b1p, w2row, b2v, *, block_b=1024):
    """x: (B, In) f32; w1p: (In, Hp); b1p: (1, Hp); w2row: (1, Hp); b2v: (1,).

    Hp must be a multiple of 128 (lane-dense padded hidden dim).
    """
    B, In = x.shape
    Hp = w1p.shape[1]
    O = 1

    # Batch tile: as large as possible (per-grid-step overhead dominates small
    # tiles).  Round to a multiple of 16 so the tile stays layout-dense even if
    # x is ever carried in a packed (bf16) dtype.
    Bp = ((B + 15) // 16) * 16
    if Bp <= block_b:
        bt = Bp                                   # single grid step for small B
    else:
        bt = max(16, (block_b // 128) * 128)      # keep bt a multiple of 128
        Bp = pl.cdiv(Bp, bt) * bt
    # Only touch x again in HBM if padding is actually required (common case: no pad).
    xp = x if Bp == B else jnp.pad(x, ((0, Bp - B), (0, 0)))

    grid = (Bp // bt,)
    cost = pl.CostEstimate(
        flops=2 * Bp * In * Hp + 3 * Bp * Hp,            # fc1 + (mul + reduce + bias)
        transcendentals=Bp * O,                          # sigmoid
        bytes_accessed=(xp.size + w1p.size + b1p.size + w2row.size
                        + b2v.size + Bp * O) * 4,
    )

    out = pl.pallas_call(
        mlp_kernel,
        out_shape=jax.ShapeDtypeStruct((Bp, O), jnp.float32),
        grid_spec=pltpu.PrefetchScalarGridSpec(
            num_scalar_prefetch=0,
            grid=grid,
            in_specs=[
                pl.BlockSpec((bt, In), lambda i: (i, 0)),            # x streams (double-buffered)
                pl.BlockSpec(memory_space=pltpu.MemorySpace.VMEM),   # w1 resident, single copy
                pl.BlockSpec(memory_space=pltpu.MemorySpace.VMEM),   # b1 resident
                pl.BlockSpec(memory_space=pltpu.MemorySpace.VMEM),   # w2 row resident
                pl.BlockSpec(memory_space=pltpu.MemorySpace.SMEM),   # b2 scalar
            ],
            out_specs=pl.BlockSpec((bt, O), lambda i: (i, 0)),
        ),
        compiler_params=pltpu.CompilerParams(
            dimension_semantics=("parallel",),   # megacore split on v7x; no-op on v5e/v6e
        ),
        cost_estimate=cost,
    )(xp, w1p, b1p, w2row, b2v)
    return out[:B]


def init_params(key, input_size=768, hidden_size=100, output_size=1):
    """Deterministic init mimicking nn.Linear's U(-1/sqrt(fan_in), 1/sqrt(fan_in))."""
    k1, k2, k3, k4 = jax.random.split(key, 4)
    bound1 = 1.0 / jnp.sqrt(jnp.float32(input_size))
    bound2 = 1.0 / jnp.sqrt(jnp.float32(hidden_size))
    # stored pre-transposed: (in, out)
    w1 = jax.random.uniform(k1, (input_size, hidden_size), jnp.float32, -bound1, bound1)
    b1 = jax.random.uniform(k2, (1, hidden_size), jnp.float32, -bound1, bound1)
    w2 = jax.random.uniform(k3, (hidden_size, output_size), jnp.float32, -bound2, bound2)
    b2 = jax.random.uniform(k4, (1, output_size), jnp.float32, -bound2, bound2)
    return w1, b1, w2, b2


def pad_params(w1, b1, w2, b2):
    """One-time (static) weight prep: zero-pad hidden dim to a multiple of 128
    (lane-dense, numerically identical: ReLU(0*x + 0) = 0 and the padded w2
    entries are zero).  Kept in f32 for tight parity with the reference; a
    one-time bf16 cast of w1 here is an option if HBM traffic ever matters."""
    H = w1.shape[1]
    Hp = ((H + 127) // 128) * 128
    pad = Hp - H
    w1p = jnp.pad(w1, ((0, 0), (0, pad)))        # (In, Hp)
    b1p = jnp.pad(b1, ((0, 0), (0, pad)))        # (1, Hp)
    w2row = jnp.pad(w2.T, ((0, 0), (0, pad)))    # (1, Hp)
    b2v = b2.reshape(-1)                         # (1,) scalar for SMEM
    return w1p, b1p, w2row, b2v


if __name__ == "__main__":
    key = jax.random.PRNGKey(0)
    k_x, k_p = jax.random.split(key)

    B, INPUT, HIDDEN, OUTPUT = 256, 768, 100, 1
    x = jax.random.normal(k_x, (B, INPUT), jnp.float32)
    w1, b1, w2, b2 = init_params(k_p, INPUT, HIDDEN, OUTPUT)
    w1p, b1p, w2row, b2v = pad_params(w1, b1, w2, b2)

    out = mlp_forward(x, w1p, b1p, w2row, b2v)
    out = jax.block_until_ready(out)

    # Pure-JAX f32 reference with the ORIGINAL (unpadded) params.
    ref = jax.nn.sigmoid(jnp.maximum(x @ w1 + b1, 0.0) @ w2 + b2)
    assert out.shape == (B, OUTPUT)
    assert jnp.allclose(out, ref, atol=2e-3, rtol=2e-3)

    print("KERNEL_OK")
</pallas_src>

<mosaic_0001>
module attributes {stable_mosaic.version = 11 : i64} {
  func.func @mlp_kernel(%arg0: i32, %arg1: memref<256x768xf32, #tpu.memory_space<vmem>>, %arg2: memref<768x128xf32, #tpu.memory_space<vmem>>, %arg3: memref<1x128xf32, #tpu.memory_space<vmem>>, %arg4: memref<1x128xf32, #tpu.memory_space<vmem>>, %arg5: memref<1xf32, #tpu.memory_space<smem>>, %arg6: memref<256x1xf32, #tpu.memory_space<vmem>>) attributes {dimension_semantics = [#tpu.dimension_semantics<parallel>], iteration_bounds = array<i64: 1>, scalar_prefetch = 0 : i64, scratch_operands = 0 : i64, tpu.core_type = #tpu.core_type<tc>, window_params = [{transform_indices = @transform_0, window_bounds = array<i64: 256, 768>}, {pipeline_mode = #tpu.pipeline_mode<synchronous>, transform_indices = @transform_1, window_bounds = array<i64: 768, 128>}, {pipeline_mode = #tpu.pipeline_mode<synchronous>, transform_indices = @transform_2, window_bounds = array<i64: 1, 128>}, {pipeline_mode = #tpu.pipeline_mode<synchronous>, transform_indices = @transform_3, window_bounds = array<i64: 1, 128>}, {transform_indices = @transform_4, window_bounds = array<i64: 1>}, {transform_indices = @transform_5, window_bounds = array<i64: 256, 1>}]} {
    %c0 = arith.constant 0 : index
    %c0_0 = arith.constant 0 : index
    %0 = vector.load %arg1[%c0, %c0_0] : memref<256x768xf32, #tpu.memory_space<vmem>>, vector<256x768xf32>
    %c0_1 = arith.constant 0 : index
    %c0_2 = arith.constant 0 : index
    %1 = vector.load %arg2[%c0_1, %c0_2] : memref<768x128xf32, #tpu.memory_space<vmem>>, vector<768x128xf32>
    %cst = arith.constant dense<0.000000e+00> : vector<256x128xf32>
    %2 = tpu.matmul %0, %1, %cst {dimension_numbers = #tpu.dot_dimension_numbers<[1], [0], [0], [1], [0, 0, 1, 1], [], []>} : vector<256x768xf32>, vector<768x128xf32>, vector<256x128xf32> -> vector<256x128xf32>
    %c0_3 = arith.constant 0 : index
    %c0_4 = arith.constant 0 : index
    %3 = vector.load %arg3[%c0_3, %c0_4] : memref<1x128xf32, #tpu.memory_space<vmem>>, vector<1x128xf32>
    %4 = vector.broadcast %3 : vector<1x128xf32> to vector<256x128xf32>
    %5 = arith.addf %2, %4 : vector<256x128xf32>
    %cst_5 = arith.constant 0.000000e+00 : f32
    %6 = vector.broadcast %cst_5 : f32 to vector<256x128xf32>
    %7 = arith.maximumf %5, %6 : vector<256x128xf32>
    %c0_6 = arith.constant 0 : index
    %c0_7 = arith.constant 0 : index
    %8 = vector.load %arg4[%c0_6, %c0_7] : memref<1x128xf32, #tpu.memory_space<vmem>>, vector<1x128xf32>
    %9 = vector.broadcast %8 : vector<1x128xf32> to vector<256x128xf32>
    %10 = arith.mulf %7, %9 : vector<256x128xf32>
    %cst_8 = arith.constant dense<0.000000e+00> : vector<256xf32>
    %11 = vector.multi_reduction <add>, %10, %cst_8 [1] : vector<256x128xf32> to vector<256xf32>
    %12 = vector.shape_cast %11 : vector<256xf32> to vector<256x1xf32>
    %c0_9 = arith.constant 0 : index
    %13 = memref.load %arg5[%c0_9] : memref<1xf32, #tpu.memory_space<smem>>
    %14 = vector.broadcast %13 : f32 to vector<256x1xf32>
    %15 = arith.addf %12, %14 : vector<256x1xf32>
    %16 = arith.negf %15 : vector<256x1xf32>
    %17 = math.exp %16 : vector<256x1xf32>
    %cst_10 = arith.constant 1.000000e+00 : f32
    %18 = vector.broadcast %cst_10 : f32 to vector<256x1xf32>
    %19 = arith.addf %18, %17 : vector<256x1xf32>
    %20 = arith.divf %18, %19 : vector<256x1xf32>
    %c0_11 = arith.constant 0 : index
    %c0_12 = arith.constant 0 : index
    %21 = vector.load %arg6[%c0_11, %c0_12] : memref<256x1xf32, #tpu.memory_space<vmem>>, vector<256x1xf32>
    tpu.vector_store %arg6[%c0_11, %c0_12], %20 {strides = array<i32>} : memref<256x1xf32, #tpu.memory_space<vmem>>, vector<256x1xf32>,
    return
  }
  func.func @transform_0(%arg0: i32) -> (i32, i32) {
    %c0_i32 = arith.constant 0 : i32
    %c0_i32_0 = arith.constant 0 : i32
    return %arg0, %c0_i32 : i32, i32
  }
  func.func @transform_1(%arg0: i32) -> (i32, i32) {
    %c0_i32 = arith.constant 0 : i32
    %c0_i32_0 = arith.constant 0 : i32
    %c0_i32_1 = arith.constant 0 : i32
    return %c0_i32, %c0_i32_0 : i32, i32
  }
  func.func @transform_2(%arg0: i32) -> (i32, i32) {
    %c0_i32 = arith.constant 0 : i32
    %c0_i32_0 = arith.constant 0 : i32
    %c0_i32_1 = arith.constant 0 : i32
    return %c0_i32, %c0_i32_0 : i32, i32
  }
  func.func @transform_3(%arg0: i32) -> (i32, i32) {
    %c0_i32 = arith.constant 0 : i32
    %c0_i32_0 = arith.constant 0 : i32
    %c0_i32_1 = arith.constant 0 : i32
    return %c0_i32, %c0_i32_0 : i32, i32
  }
  func.func @transform_4(%arg0: i32) -> i32 {
    %c0_i32 = arith.constant 0 : i32
    %c0_i32_0 = arith.constant 0 : i32
    return %c0_i32 : i32
  }
  func.func @transform_5(%arg0: i32) -> (i32, i32) {
    %c0_i32 = arith.constant 0 : i32
    %c0_i32_0 = arith.constant 0 : i32
    return %arg0, %c0_i32 : i32, i32
  }
}

</mosaic_0001>

<llo_original>
// kernel: tpu_custom_call.1
$region0: #{tpu_custom_call.1}
  #allocation0 [shape = 'u32[]', space=smem, size = 0x4, offset = 0x4, fixed_abs, tag = 'smem constant byte address 0x4 - core index']
  #allocation1 [shape = 'u32[144,128]{1,0:T(1,128)}', space=vmem, size = 0x12000, scoped, tag = 'internal scratch']
  #allocation2 [shape = 'f32[1]{0:T(128)S(6)}', space=smem, size = 0x200, scoped, tag = 'scoped memory for tpu_custom_call.1']
  %s0 = inlined_call_operand.hbm [shape: f32[256,768], index: 0, kind: input, shape index: {}]
  %s1 = inlined_call_operand.hbm [shape: f32[768,128], index: 1, kind: input, shape index: {}]
  %s2 = inlined_call_operand.vmem [shape: f32[1,128], index: 2, kind: input, shape index: {}]
  %s3 = inlined_call_operand.vmem [shape: f32[1,128], index: 3, kind: input, shape index: {}]
  %s4 = inlined_call_operand.<no memory space> [shape: f32[1], index: 4, kind: input, shape index: {}]
  %s5 = inlined_call_operand.vmem [shape: f32[256,1], index: 5, kind: output, shape index: {}]
  %s6 = sld [smem:[#allocation0]]
  $region38: #{tpu_custom_call.1} parent=0
    _
  %s8 = ssub.s32 1, %s6
  %s9 = scalar_select 0, %s8, %s6
  %10 = sst [smem:[#allocation2]] %s4
  $region1: #{tpu_custom_call.1} parent=0
    #allocation3 [shape = 'u8[786432]{0}', space=vmem, size = 0xc0000, scoped, tag = 'input window, operand 0, single buffered']
    #allocation4 [shape = 's32[1]{0}', space=sflag, size = 0x4, scoped, tag = 'scoped memory for tpu_custom_call.1']
    #allocation5 [shape = 'u8[393216]{0}', space=vmem, size = 0x60000, scoped, tag = 'input window, operand 1, single buffered']
    #allocation6 [shape = 's32[1]{0}', space=sflag, size = 0x4, scoped, tag = 'scoped memory for tpu_custom_call.1']
    %11 = vsyncpa [#allocation4], 0
    %12 = vsyncpa [#allocation6], 0
    // Predicated region
    $region2: #{tpu_custom_call.1} parent=1 // pred_check
      _
    $region3: #{tpu_custom_call.1} parent=1 // pred_check_branch
      %14 = sbr.rel (0) target = $region5
    $region4: #{tpu_custom_call.1} parent=1 // pred_region
      %s16 = ssub.s32 24576, 24576
      %17 = vsyncadd [#allocation4], %s16
      %s18 = sshll.u32 [#allocation3], 4
      %s19 = int_to_ptr.vmem [resolvable:$true] %s18
      %24 = dma.hbm_to_vmem [thread:$0]  %s0, 24576, %s19, [#allocation4], 768, 768, 48
    $region5: #{tpu_custom_call.1} parent=1 // pred_fallthru
      _
    // Predicated region
    $region6: #{tpu_custom_call.1} parent=1 // pred_check
      _
    $region7: #{tpu_custom_call.1} parent=1 // pred_check_branch
      %26 = sbr.rel (0) target = $region9
    $region8: #{tpu_custom_call.1} parent=1 // pred_region
      %s28 = ssub.s32 12288, 12288
      %29 = vsyncadd [#allocation6], %s28
      %s30 = sshll.u32 [#allocation5], 4
      %s31 = int_to_ptr.vmem [resolvable:$true] %s30
      %36 = dma.hbm_to_vmem [thread:$0]  %s1, 12288, %s31, [#allocation6], 128, 128, 8
    $region9: #{tpu_custom_call.1} parent=1 // pred_fallthru
      _
    // Predicated region
    $region10: #{tpu_custom_call.1} parent=1 // pred_check
      _
    $region11: #{tpu_custom_call.1} parent=1 // pred_check_branch
      %38 = sbr.rel (0) target = $region13
    $region12: #{tpu_custom_call.1} parent=1 // pred_region
      _
    $region13: #{tpu_custom_call.1} parent=1 // pred_fallthru
      _
    // Predicated region
    $region14: #{tpu_custom_call.1} parent=1 // pred_check
      _
    $region15: #{tpu_custom_call.1} parent=1 // pred_check_branch
      %40 = sbr.rel (0) target = $region17
    $region16: #{tpu_custom_call.1} parent=1 // pred_region
      _
    $region17: #{tpu_custom_call.1} parent=1 // pred_fallthru
      _
    // Predicated region
    $region18: #{tpu_custom_call.1} parent=1 // pred_check
      _
    $region19: #{tpu_custom_call.1} parent=1 // pred_check_branch
      %42 = sbr.rel (0) target = $region21
    $region20: #{tpu_custom_call.1} parent=1 // pred_region
      _
    $region21: #{tpu_custom_call.1} parent=1 // pred_fallthru
      _
    // Predicated region
    $region22: #{tpu_custom_call.1} parent=1 // pred_check
      _
    $region23: #{tpu_custom_call.1} parent=1 // pred_check_branch
      %44 = sbr.rel (0) target = $region25
    $region24: #{tpu_custom_call.1} parent=1 // pred_region
      %45 = dma.done [#allocation4], 24576
    $region25: #{tpu_custom_call.1} parent=1 // pred_fallthru
      _
    // Predicated region
    $region26: #{tpu_custom_call.1} parent=1 // pred_check
      _
    $region27: #{tpu_custom_call.1} parent=1 // pred_check_branch
      %47 = sbr.rel (0) target = $region29
    $region28: #{tpu_custom_call.1} parent=1 // pred_region
      %48 = dma.done [#allocation6], 12288
    $region29: #{tpu_custom_call.1} parent=1 // pred_fallthru
      _
    %v49 = vld [vmem:[#allocation3] sm:$0xff]
    %v50 = vld [vmem:[#allocation3 + $0x8] sm:$0xff]
    %v51 = vld [vmem:[#allocation3 + $0x10] sm:$0xff]
    %v52 = vld [vmem:[#allocation3 + $0x18] sm:$0xff]
    %v53 = vld [vmem:[#allocation3 + $0x20] sm:$0xff]
    %v54 = vld [vmem:[#allocation3 + $0x28] sm:$0xff]
    %v55 = vld [vmem:[#allocation3 + $0x30] sm:$0xff]
    %v56 = vld [vmem:[#allocation3 + $0x38] sm:$0xff]
    %v57 = vld [vmem:[#allocation3 + $0x40] sm:$0xff]
    %v58 = vld [vmem:[#allocation3 + $0x48] sm:$0xff]
    %v59 = vld [vmem:[#allocation3 + $0x50] sm:$0xff]
    %v60 = vld [vmem:[#allocation3 + $0x58] sm:$0xff]
    %v61 = vld [vmem:[#allocation3 + $0x60] sm:$0xff]
    %v62 = vld [vmem:[#allocation3 + $0x68] sm:$0xff]
    %v63 = vld [vmem:[#allocation3 + $0x70] sm:$0xff]
    %v64 = vld [vmem:[#allocation3 + $0x78] sm:$0xff]
    %v65 = vld [vmem:[#allocation3 + $0x80] sm:$0xff]
    %v66 = vld [vmem:[#allocation3 + $0x88] sm:$0xff]
    %v67 = vld [vmem:[#allocation3 + $0x90] sm:$0xff]
    %v68 = vld [vmem:[#allocation3 + $0x98] sm:$0xff]
    %v69 = vld [vmem:[#allocation3 + $0xa0] sm:$0xff]
    %v70 = vld [vmem:[#allocation3 + $0xa8] sm:$0xff]
    %v71 = vld [vmem:[#allocation3 + $0xb0] sm:$0xff]
    %v72 = vld [vmem:[#allocation3 + $0xb8] sm:$0xff]
    %v73 = vld [vmem:[#allocation3 + $0xc0] sm:$0xff]
    %v74 = vld [vmem:[#allocation3 + $0xc8] sm:$0xff]
    %v75 = vld [vmem:[#allocation3 + $0xd0] sm:$0xff]
    %v76 = vld [vmem:[#allocation3 + $0xd8] sm:$0xff]
    %v77 = vld [vmem:[#allocation3 + $0xe0] sm:$0xff]
    %v78 = vld [vmem:[#allocation3 + $0xe8] sm:$0xff]
    %v79 = vld [vmem:[#allocation3 + $0xf0] sm:$0xff]
    %v80 = vld [vmem:[#allocation3 + $0xf8] sm:$0xff]
    %v81 = vld [vmem:[#allocation3 + $0x100] sm:$0xff]
    %v82 = vld [vmem:[#allocation3 + $0x108] sm:$0xff]
    %v83 = vld [vmem:[#allocation3 + $0x110] sm:$0xff]
    %v84 = vld [vmem:[#allocation3 + $0x118] sm:$0xff]
    %v85 = vld [vmem:[#allocation3 + $0x120] sm:$0xff]
    %v86 = vld [vmem:[#allocation3 + $0x128] sm:$0xff]
    %v87 = vld [vmem:[#allocation3 + $0x130] sm:$0xff]
    %v88 = vld [vmem:[#allocation3 + $0x138] sm:$0xff]
    %v89 = vld [vmem:[#allocation3 + $0x140] sm:$0xff]
    %v90 = vld [vmem:[#allocation3 + $0x148] sm:$0xff]
    %v91 = vld [vmem:[#allocation3 + $0x150] sm:$0xff]
    %v92 = vld [vmem:[#allocation3 + $0x158] sm:$0xff]
    %v93 = vld [vmem:[#allocation3 + $0x160] sm:$0xff]
    %v94 = vld [vmem:[#allocation3 + $0x168] sm:$0xff]
    %v95 = vld [vmem:[#allocation3 + $0x170] sm:$0xff]
    %v96 = vld [vmem:[#allocation3 + $0x178] sm:$0xff]
    %v97 = vld [vmem:[#allocation3 + $0x180] sm:$0xff]
    %v98 = vld [vmem:[#allocation3 + $0x188] sm:$0xff]
    %v99 = vld [vmem:[#allocation3 + $0x190] sm:$0xff]
    %v100 = vld [vmem:[#allocation3 + $0x198] sm:$0xff]
    %v101 = vld [vmem:[#allocation3 + $0x1a0] sm:$0xff]
    %v102 = vld [vmem:[#allocation3 + $0x1a8] sm:$0xff]
    %v103 = vld [vmem:[#allocation3 + $0x1b0] sm:$0xff]
    %v104 = vld [vmem:[#allocation3 + $0x1b8] sm:$0xff]
    %v105 = vld [vmem:[#allocation3 + $0x1c0] sm:$0xff]
    %v106 = vld [vmem:[#allocation3 + $0x1c8] sm:$0xff]
    %v107 = vld [vmem:[#allocation3 + $0x1d0] sm:$0xff]
    %v108 = vld [vmem:[#allocation3 + $0x1d8] sm:$0xff]
    %v109 = vld [vmem:[#allocation3 + $0x1e0] sm:$0xff]
    %v110 = vld [vmem:[#allocation3 + $0x1e8] sm:$0xff]
    %v111 = vld [vmem:[#allocation3 + $0x1f0] sm:$0xff]
    %v112 = vld [vmem:[#allocation3 + $0x1f8] sm:$0xff]
    %v113 = vld [vmem:[#allocation3 + $0x200] sm:$0xff]
    %v114 = vld [vmem:[#allocation3 + $0x208] sm:$0xff]
    %v115 = vld [vmem:[#allocation3 + $0x210] sm:$0xff]
    %v116 = vld [vmem:[#allocation3 + $0x218] sm:$0xff]
    %v117 = vld [vmem:[#allocation3 + $0x220] sm:$0xff]
    %v118 = vld [vmem:[#allocation3 + $0x228] sm:$0xff]
    %v119 = vld [vmem:[#allocation3 + $0x230] sm:$0xff]
    %v120 = vld [vmem:[#allocation3 + $0x238] sm:$0xff]
    %v121 = vld [vmem:[#allocation3 + $0x240] sm:$0xff]
    %v122 = vld [vmem:[#allocation3 + $0x248] sm:$0xff]
    %v123 = vld [vmem:[#allocation3 + $0x250] sm:$0xff]
    %v124 = vld [vmem:[#allocation3 + $0x258] sm:$0xff]
    %v125 = vld [vmem:[#allocation3 + $0x260] sm:$0xff]
    %v126 = vld [vmem:[#allocation3 + $0x268] sm:$0xff]
    %v127 = vld [vmem:[#allocation3 + $0x270] sm:$0xff]
    %v128 = vld [vmem:[#allocation3 + $0x278] sm:$0xff]
    %v129 = vld [vmem:[#allocation3 + $0x280] sm:$0xff]
    %v130 = vld [vmem:[#allocation3 + $0x288] sm:$0xff]
    %v131 = vld [vmem:[#allocation3 + $0x290] sm:$0xff]
    %v132 = vld [vmem:[#allocation3 + $0x298] sm:$0xff]
    %v133 = vld [vmem:[#allocation3 + $0x2a0] sm:$0xff]
    %v134 = vld [vmem:[#allocation3 + $0x2a8] sm:$0xff]
    %v135 = vld [vmem:[#allocation3 + $0x2b0] sm:$0xff]
    %v136 = vld [vmem:[#allocation3 + $0x2b8] sm:$0xff]
    %v137 = vld [vmem:[#allocation3 + $0x2c0] sm:$0xff]
    %v138 = vld [vmem:[#allocation3 + $0x2c8] sm:$0xff]
    %v139 = vld [vmem:[#allocation3 + $0x2d0] sm:$0xff]
    %v140 = vld [vmem:[#allocation3 + $0x2d8] sm:$0xff]
    %v141 = vld [vmem:[#allocation3 + $0x2e0] sm:$0xff]
    %v142 = vld [vmem:[#allocation3 + $0x2e8] sm:$0xff]
    %v143 = vld [vmem:[#allocation3 + $0x2f0] sm:$0xff]
    %v144 = vld [vmem:[#allocation3 + $0x2f8] sm:$0xff]
    %v145 = vld [vmem:[#allocation3 + $0x300] sm:$0xff]
    %v146 = vld [vmem:[#allocation3 + $0x308] sm:$0xff]
    %v147 = vld [vmem:[#allocation3 + $0x310] sm:$0xff]
    %v148 = vld [vmem:[#allocation3 + $0x318] sm:$0xff]
    %v149 = vld [vmem:[#allocation3 + $0x320] sm:$0xff]
    %v150 = vld [vmem:[#allocation3 + $0x328] sm:$0xff]
    %v151 = vld [vmem:[#allocation3 + $0x330] sm:$0xff]
    %v152 = vld [vmem:[#allocation3 + $0x338] sm:$0xff]
    %v153 = vld [vmem:[#allocation3 + $0x340] sm:$0xff]
    %v154 = vld [vmem:[#allocation3 + $0x348] sm:$0xff]
    %v155 = vld [vmem:[#allocation3 + $0x350] sm:$0xff]
    %v156 = vld [vmem:[#allocation3 + $0x358] sm:$0xff]
    %v157 = vld [vmem:[#allocation3 + $0x360] sm:$0xff]
    %v158 = vld [vmem:[#allocation3 + $0x368] sm:$0xff]
    %v159 = vld [vmem:[#allocation3 + $0x370] sm:$0xff]
    %v160 = vld [vmem:[#allocation3 + $0x378] sm:$0xff]
    %v161 = vld [vmem:[#allocation3 + $0x380] sm:$0xff]
    %v162 = vld [vmem:[#allocation3 + $0x388] sm:$0xff]
    %v163 = vld [vmem:[#allocation3 + $0x390] sm:$0xff]
    %v164 = vld [vmem:[#allocation3 + $0x398] sm:$0xff]
    %v165 = vld [vmem:[#allocation3 + $0x3a0] sm:$0xff]
    %v166 = vld [vmem:[#allocation3 + $0x3a8] sm:$0xff]
    %v167 = vld [vmem:[#allocation3 + $0x3b0] sm:$0xff]
    %v168 = vld [vmem:[#allocation3 + $0x3b8] sm:$0xff]
    %v169 = vld [vmem:[#allocation3 + $0x3c0] sm:$0xff]
    %v170 = vld [vmem:[#allocation3 + $0x3c8] sm:$0xff]
    %v171 = vld [vmem:[#allocation3 + $0x3d0] sm:$0xff]
    %v172 = vld [vmem:[#allocation3 + $0x3d8] sm:$0xff]
    %v173 = vld [vmem:[#allocation3 + $0x3e0] sm:$0xff]
    %v174 = vld [vmem:[#allocation3 + $0x3e8] sm:$0xff]
    %v175 = vld [vmem:[#allocation3 + $0x3f0] sm:$0xff]
    %v176 = vld [vmem:[#allocation3 + $0x3f8] sm:$0xff]
    %v177 = vld [vmem:[#allocation3 + $0x400] sm:$0xff]
    %v178 = vld [vmem:[#allocation3 + $0x408] sm:$0xff]
    %v179 = vld [vmem:[#allocation3 + $0x410] sm:$0xff]
    %v180 = vld [vmem:[#allocation3 + $0x418] sm:$0xff]
    %v181 = vld [vmem:[#allocation3 + $0x420] sm:$0xff]
    %v182 = vld [vmem:[#allocation3 + $0x428] sm:$0xff]
    %v183 = vld [vmem:[#allocation3 + $0x430] sm:$0xff]
    %v184 = vld [vmem:[#allocation3 + $0x438] sm:$0xff]
    %v185 = vld [vmem:[#allocation3 + $0x440] sm:$0xff]
    %v186 = vld [vmem:[#allocation3 + $0x448] sm:$0xff]
    %v187 = vld [vmem:[#allocation3 + $0x450] sm:$0xff]
    %v188 = vld [vmem:[#allocation3 + $0x458] sm:$0xff]
    %v189 = vld [vmem:[#allocation3 + $0x460] sm:$0xff]
    %v190 = vld [vmem:[#allocation3 + $0x468] sm:$0xff]
    %v191 = vld [vmem:[#allocation3 + $0x470] sm:$0xff]
    %v192 = vld [vmem:[#allocation3 + $0x478] sm:$0xff]
    %v193 = vld [vmem:[#allocation3 + $0x480] sm:$0xff]
    %v194 = vld [vmem:[#allocation3 + $0x488] sm:$0xff]
    %v195 = vld [vmem:[#allocation3 + $0x490] sm:$0xff]
    %v196 = vld [vmem:[#allocation3 + $0x498] sm:$0xff]
    %v197 = vld [vmem:[#allocation3 + $0x4a0] sm:$0xff]
    %v198 = vld [vmem:[#allocation3 + $0x4a8] sm:$0xff]
    %v199 = vld [vmem:[#allocation3 + $0x4b0] sm:$0xff]
    %v200 = vld [vmem:[#allocation3 + $0x4b8] sm:$0xff]
    %v201 = vld [vmem:[#allocation3 + $0x4c0] sm:$0xff]
    %v202 = vld [vmem:[#allocation3 + $0x4c8] sm:$0xff]
    %v203 = vld [vmem:[#allocation3 + $0x4d0] sm:$0xff]
    %v204 = vld [vmem:[#allocation3 + $0x4d8] sm:$0xff]
    %v205 = vld [vmem:[#allocation3 + $0x4e0] sm:$0xff]
    %v206 = vld [vmem:[#allocation3 + $0x4e8] sm:$0xff]
    %v207 = vld [vmem:[#allocation3 + $0x4f0] sm:$0xff]
    %v208 = vld [vmem:[#allocation3 + $0x4f8] sm:$0xff]
    %v209 = vld [vmem:[#allocation3 + $0x500] sm:$0xff]
    %v210 = vld [vmem:[#allocation3 + $0x508] sm:$0xff]
    %v211 = vld [vmem:[#allocation3 + $0x510] sm:$0xff]
    %v212 = vld [vmem:[#allocation3 + $0x518] sm:$0xff]
    %v213 = vld [vmem:[#allocation3 + $0x520] sm:$0xff]
    %v214 = vld [vmem:[#allocation3 + $0x528] sm:$0xff]
    %v215 = vld [vmem:[#allocation3 + $0x530] sm:$0xff]
    %v216 = vld [vmem:[#allocation3 + $0x538] sm:$0xff]
    %v217 = vld [vmem:[#allocation3 + $0x540] sm:$0xff]
    %v218 = vld [vmem:[#allocation3 + $0x548] sm:$0xff]
    %v219 = vld [vmem:[#allocation3 + $0x550] sm:$0xff]
    %v220 = vld [vmem:[#allocation3 + $0x558] sm:$0xff]
    %v221 = vld [vmem:[#allocation3 + $0x560] sm:$0xff]
    %v222 = vld [vmem:[#allocation3 + $0x568] sm:$0xff]
    %v223 = vld [vmem:[#allocation3 + $0x570] sm:$0xff]
    %v224 = vld [vmem:[#allocation3 + $0x578] sm:$0xff]
    %v225 = vld [vmem:[#allocation3 + $0x580] sm:$0xff]
    %v226 = vld [vmem:[#allocation3 + $0x588] sm:$0xff]
    %v227 = vld [vmem:[#allocation3 + $0x590] sm:$0xff]
    %v228 = vld [vmem:[#allocation3 + $0x598] sm:$0xff]
    %v229 = vld [vmem:[#allocation3 + $0x5a0] sm:$0xff]
    %v230 = vld [vmem:[#allocation3 + $0x5a8] sm:$0xff]
    %v231 = vld [vmem:[#allocation3 + $0x5b0] sm:$0xff]
    %v232 = vld [vmem:[#allocation3 + $0x5b8] sm:$0xff]
    %v233 = vld [vmem:[#allocation3 + $0x5c0] sm:$0xff]
    %v234 = vld [vmem:[#allocation3 + $0x5c8] sm:$0xff]
    %v235 = vld [vmem:[#allocation3 + $0x5d0] sm:$0xff]
    %v236 = vld [vmem:[#allocation3 + $0x5d8] sm:$0xff]
    %v237 = vld [vmem:[#allocation3 + $0x5e0] sm:$0xff]
    %v238 = vld [vmem:[#allocation3 + $0x5e8] sm:$0xff]
    %v239 = vld [vmem:[#allocation3 + $0x5f0] sm:$0xff]
    %v240 = vld [vmem:[#allocation3 + $0x5f8] sm:$0xff]
    %v241 = vld [vmem:[#allocation5] sm:$0xff]
    %v242 = vld [vmem:[#allocation5 + $0x8] sm:$0xff]
    %v243 = vld [vmem:[#allocation5 + $0x10] sm:$0xff]
    %v244 = vld [vmem:[#allocation5 + $0x18] sm:$0xff]
    %v245 = vld [vmem:[#allocation5 + $0x20] sm:$0xff]
    %v246 = vld [vmem:[#allocation5 + $0x28] sm:$0xff]
    %v247 = vld [vmem:[#allocation5 + $0x30] sm:$0xff]
    %v248 = vld [vmem:[#allocation5 + $0x38] sm:$0xff]
    %v249 = vld [vmem:[#allocation5 + $0x40] sm:$0xff]
    %v250 = vld [vmem:[#allocation5 + $0x48] sm:$0xff]
    %v251 = vld [vmem:[#allocation5 + $0x50] sm:$0xff]
    %v252 = vld [vmem:[#allocation5 + $0x58] sm:$0xff]
    %v253 = vld [vmem:[#allocation5 + $0x60] sm:$0xff]
    %v254 = vld [vmem:[#allocation5 + $0x68] sm:$0xff]
    %v255 = vld [vmem:[#allocation5 + $0x70] sm:$0xff]
    %v256 = vld [vmem:[#allocation5 + $0x78] sm:$0xff]
    %v257 = vld [vmem:[#allocation5 + $0x80] sm:$0xff]
    %v258 = vld [vmem:[#allocation5 + $0x88] sm:$0xff]
    %v259 = vld [vmem:[#allocation5 + $0x90] sm:$0xff]
    %v260 = vld [vmem:[#allocation5 + $0x98] sm:$0xff]
    %v261 = vld [vmem:[#allocation5 + $0xa0] sm:$0xff]
    %v262 = vld [vmem:[#allocation5 + $0xa8] sm:$0xff]
    %v263 = vld [vmem:[#allocation5 + $0xb0] sm:$0xff]
    %v264 = vld [vmem:[#allocation5 + $0xb8] sm:$0xff]
    %v265 = vld [vmem:[#allocation5 + $0xc0] sm:$0xff]
    %v266 = vld [vmem:[#allocation5 + $0xc8] sm:$0xff]
    %v267 = vld [vmem:[#allocation5 + $0xd0] sm:$0xff]
    %v268 = vld [vmem:[#allocation5 + $0xd8] sm:$0xff]
    %v269 = vld [vmem:[#allocation5 + $0xe0] sm:$0xff]
    %v270 = vld [vmem:[#allocation5 + $0xe8] sm:$0xff]
    %v271 = vld [vmem:[#allocation5 + $0xf0] sm:$0xff]
    %v272 = vld [vmem:[#allocation5 + $0xf8] sm:$0xff]
    %v273 = vld [vmem:[#allocation5 + $0x100] sm:$0xff]
    %v274 = vld [vmem:[#allocation5 + $0x108] sm:$0xff]
    %v275 = vld [vmem:[#allocation5 + $0x110] sm:$0xff]
    %v276 = vld [vmem:[#allocation5 + $0x118] sm:$0xff]
    %v277 = vld [vmem:[#allocation5 + $0x120] sm:$0xff]
    %v278 = vld [vmem:[#allocation5 + $0x128] sm:$0xff]
    %v279 = vld [vmem:[#allocation5 + $0x130] sm:$0xff]
    %v280 = vld [vmem:[#allocation5 + $0x138] sm:$0xff]
    %v281 = vld [vmem:[#allocation5 + $0x140] sm:$0xff]
    %v282 = vld [vmem:[#allocation5 + $0x148] sm:$0xff]
    %v283 = vld [vmem:[#allocation5 + $0x150] sm:$0xff]
    %v284 = vld [vmem:[#allocation5 + $0x158] sm:$0xff]
    %v285 = vld [vmem:[#allocation5 + $0x160] sm:$0xff]
    %v286 = vld [vmem:[#allocation5 + $0x168] sm:$0xff]
    %v287 = vld [vmem:[#allocation5 + $0x170] sm:$0xff]
    %v288 = vld [vmem:[#allocation5 + $0x178] sm:$0xff]
    %v289 = vld [vmem:[#allocation5 + $0x180] sm:$0xff]
    %v290 = vld [vmem:[#allocation5 + $0x188] sm:$0xff]
    %v291 = vld [vmem:[#allocation5 + $0x190] sm:$0xff]
    %v292 = vld [vmem:[#allocation5 + $0x198] sm:$0xff]
    %v293 = vld [vmem:[#allocation5 + $0x1a0] sm:$0xff]
    %v294 = vld [vmem:[#allocation5 + $0x1a8] sm:$0xff]
    %v295 = vld [vmem:[#allocation5 + $0x1b0] sm:$0xff]
    %v296 = vld [vmem:[#allocation5 + $0x1b8] sm:$0xff]
    %v297 = vld [vmem:[#allocation5 + $0x1c0] sm:$0xff]
    %v298 = vld [vmem:[#allocation5 + $0x1c8] sm:$0xff]
    %v299 = vld [vmem:[#allocation5 + $0x1d0] sm:$0xff]
    %v300 = vld [vmem:[#allocation5 + $0x1d8] sm:$0xff]
    %v301 = vld [vmem:[#allocation5 + $0x1e0] sm:$0xff]
    %v302 = vld [vmem:[#allocation5 + $0x1e8] sm:$0xff]
    %v303 = vld [vmem:[#allocation5 + $0x1f0] sm:$0xff]
    %v304 = vld [vmem:[#allocation5 + $0x1f8] sm:$0xff]
    %v305 = vld [vmem:[#allocation5 + $0x200] sm:$0xff]
    %v306 = vld [vmem:[#allocation5 + $0x208] sm:$0xff]
    %v307 = vld [vmem:[#allocation5 + $0x210] sm:$0xff]
    %v308 = vld [vmem:[#allocation5 + $0x218] sm:$0xff]
    %v309 = vld [vmem:[#allocation5 + $0x220] sm:$0xff]
    %v310 = vld [vmem:[#allocation5 + $0x228] sm:$0xff]
    %v311 = vld [vmem:[#allocation5 + $0x230] sm:$0xff]
    %v312 = vld [vmem:[#allocation5 + $0x238] sm:$0xff]
    %v313 = vld [vmem:[#allocation5 + $0x240] sm:$0xff]
    %v314 = vld [vmem:[#allocation5 + $0x248] sm:$0xff]
    %v315 = vld [vmem:[#allocation5 + $0x250] sm:$0xff]
    %v316 = vld [vmem:[#allocation5 + $0x258] sm:$0xff]
    %v317 = vld [vmem:[#allocation5 + $0x260] sm:$0xff]
    %v318 = vld [vmem:[#allocation5 + $0x268] sm:$0xff]
    %v319 = vld [vmem:[#allocation5 + $0x270] sm:$0xff]
    %v320 = vld [vmem:[#allocation5 + $0x278] sm:$0xff]
    %v321 = vld [vmem:[#allocation5 + $0x280] sm:$0xff]
    %v322 = vld [vmem:[#allocation5 + $0x288] sm:$0xff]
    %v323 = vld [vmem:[#allocation5 + $0x290] sm:$0xff]
    %v324 = vld [vmem:[#allocation5 + $0x298] sm:$0xff]
    %v325 = vld [vmem:[#allocation5 + $0x2a0] sm:$0xff]
    %v326 = vld [vmem:[#allocation5 + $0x2a8] sm:$0xff]
    %v327 = vld [vmem:[#allocation5 + $0x2b0] sm:$0xff]
    %v328 = vld [vmem:[#allocation5 + $0x2b8] sm:$0xff]
    %v329 = vld [vmem:[#allocation5 + $0x2c0] sm:$0xff]
    %v330 = vld [vmem:[#allocation5 + $0x2c8] sm:$0xff]
    %v331 = vld [vmem:[#allocation5 + $0x2d0] sm:$0xff]
    %v332 = vld [vmem:[#allocation5 + $0x2d8] sm:$0xff]
    %v333 = vld [vmem:[#allocation5 + $0x2e0] sm:$0xff]
    %v334 = vld [vmem:[#allocation5 + $0x2e8] sm:$0xff]
    %v335 = vld [vmem:[#allocation5 + $0x2f0] sm:$0xff]
    %v336 = vld [vmem:[#allocation5 + $0x2f8] sm:$0xff]
    %v337 = vld [vmem:[%s2] sm:$0x1]
    %v339 = vlaneseq
    %v340 = vshrl.u32 %v339, 7
    %v341 = vsub.s32 0, %v340
    %v342 = vrot.slane %v337, %v341
    %344 = vmatprep.subr.mxu0 0.0
    %345 = vmatpush1.msra.mxu0 %v241
    %346 = vmatprep.subr.mxu0 0.0
    %347 = vmatpush1.msra.mxu0 %v242
    %348 = vmatprep.subr.mxu0 0.0
    %349 = vmatpush1.msra.mxu0 %v243
    %350 = vmatprep.subr.mxu0 0.0
    %351 = vmatpush1.msra.mxu0 %v244
    %352 = vmatprep.subr.mxu0 0.0
    %353 = vmatpush1.msra.mxu0 %v245
    %354 = vmatprep.subr.mxu0 0.0
    %355 = vmatpush1.msra.mxu0 %v246
    %356 = vmatprep.subr.mxu0 0.0
    %357 = vmatpush1.msra.mxu0 %v247
    %358 = vmatprep.subr.mxu0 0.0
    %359 = vmatpush1.msra.mxu0 %v248
    %360 = vmatprep.subr.mxu0 0.0
    %361 = vmatpush1.msra.mxu0 %v249
    %362 = vmatprep.subr.mxu0 0.0
    %363 = vmatpush1.msra.mxu0 %v250
    %364 = vmatprep.subr.mxu0 0.0
    %365 = vmatpush1.msra.mxu0 %v251
    %366 = vmatprep.subr.mxu0 0.0
    %367 = vmatpush1.msra.mxu0 %v252
    %368 = vmatprep.subr.mxu0 0.0
    %369 = vmatpush1.msra.mxu0 %v253
    %370 = vmatprep.subr.mxu0 0.0
    %371 = vmatpush1.msra.mxu0 %v254
    %372 = vmatprep.subr.mxu0 0.0
    %373 = vmatpush1.msra.mxu0 %v255
    %374 = vmatprep.subr.mxu0 0.0
    %375 = vmatpush1.msra.mxu0 %v256
    %376 = vmatprep.subr.mxu0 0.0
    %377 = vmatpush1.msra.mxu0 %v257
    %378 = vmatprep.subr.mxu0 0.0
    %379 = vmatpush1.msra.mxu0 %v258
    %380 = vmatprep.subr.mxu0 0.0
    %381 = vmatpush1.msra.mxu0 %v259
    %382 = vmatprep.subr.mxu0 0.0
    %383 = vmatpush1.msra.mxu0 %v260
    %384 = vmatprep.subr.mxu0 0.0
    %385 = vmatpush1.msra.mxu0 %v261
    %386 = vmatprep.subr.mxu0 0.0
    %387 = vmatpush1.msra.mxu0 %v262
    %388 = vmatprep.subr.mxu0 0.0
    %389 = vmatpush1.msra.mxu0 %v263
    %390 = vmatprep.subr.mxu0 0.0
    %391 = vmatpush1.msra.mxu0 %v264
    %392 = vmatprep.subr.mxu0 0.0
    %393 = vmatpush1.msra.mxu0 %v265
    %394 = vmatprep.subr.mxu0 0.0
    %395 = vmatpush1.msra.mxu0 %v266
    %396 = vmatprep.subr.mxu0 0.0
    %397 = vmatpush1.msra.mxu0 %v267
    %398 = vmatprep.subr.mxu0 0.0
    %399 = vmatpush1.msra.mxu0 %v268
    %400 = vmatprep.subr.mxu0 0.0
    %401 = vmatpush1.msra.mxu0 %v269
    %402 = vmatprep.subr.mxu0 0.0
    %403 = vmatpush1.msra.mxu0 %v270
    %404 = vmatprep.subr.mxu0 0.0
    %405 = vmatpush1.msra.mxu0 %v271
    %406 = vmatprep.subr.mxu0 0.0
    %407 = vmatpush1.msra.mxu0 %v272
    %408 = vmatprep.mubr.f32.mxu0 %v50
    %409 = vmatmul.mubr.f32.gmra.mrb[0].mxu0 %v49
    %v410 = vpop.f32.mrb[0].mxu0
    %v411 = vadd.f32 %v342, %v410
    %v412 = vpop.f32.mrb[0].mxu0
    %413 = vmatprep.mubr.f32.mxu0 %v56
    %414 = vmatmul.mubr.f32.gmra.mrb[0].mxu0 %v55
    %v415 = vpop.f32.mrb[0].mxu0
    %v416 = vadd.f32 %v342, %v415
    %v417 = vpop.f32.mrb[0].mxu0
    %418 = vmatprep.mubr.f32.mxu0 %v62
    %419 = vmatmul.mubr.f32.gmra.mrb[0].mxu0 %v61
    %v420 = vpop.f32.mrb[0].mxu0
    %v421 = vadd.f32 %v342, %v420
    %v422 = vpop.f32.mrb[0].mxu0
    %423 = vmatprep.mubr.f32.mxu0 %v68
    %424 = vmatmul.mubr.f32.gmra.mrb[0].mxu0 %v67
    %v425 = vpop.f32.mrb[0].mxu0
    %v426 = vadd.f32 %v342, %v425
    %v427 = vpop.f32.mrb[0].mxu0
    %428 = vmatprep.mubr.f32.mxu0 %v74
    %429 = vmatmul.mubr.f32.gmra.mrb[0].mxu0 %v73
    %v430 = vpop.f32.mrb[0].mxu0
    %v431 = vadd.f32 %v342, %v430
    %v432 = vpop.f32.mrb[0].mxu0
    %433 = vmatprep.mubr.f32.mxu0 %v80
    %434 = vmatmul.mubr.f32.gmra.mrb[0].mxu0 %v79
    %v435 = vpop.f32.mrb[0].mxu0
    %v436 = vadd.f32 %v342, %v435
    %v437 = vpop.f32.mrb[0].mxu0
    %438 = vmatprep.mubr.f32.mxu0 %v86
    %439 = vmatmul.mubr.f32.gmra.mrb[0].mxu0 %v85
    %v440 = vpop.f32.mrb[0].mxu0
    %v441 = vadd.f32 %v342, %v440
    %v442 = vpop.f32.mrb[0].mxu0
    %443 = vmatprep.mubr.f32.mxu0 %v92
    %444 = vmatmul.mubr.f32.gmra.mrb[0].mxu0 %v91
    %v445 = vpop.f32.mrb[0].mxu0
    %v446 = vadd.f32 %v342, %v445
    %v447 = vpop.f32.mrb[0].mxu0
    %448 = vmatprep.mubr.f32.mxu0 %v98
    %449 = vmatmul.mubr.f32.gmra.mrb[0].mxu0 %v97
    %v450 = vpop.f32.mrb[0].mxu0
    %v451 = vadd.f32 %v342, %v450
    %v452 = vpop.f32.mrb[0].mxu0
    %453 = vmatprep.mubr.f32.mxu0 %v104
    %454 = vmatmul.mubr.f32.gmra.mrb[0].mxu0 %v103
    %v455 = vpop.f32.mrb[0].mxu0
    %v456 = vadd.f32 %v342, %v455
    %v457 = vpop.f32.mrb[0].mxu0
    %458 = vmatprep.mubr.f32.mxu0 %v110
    %459 = vmatmul.mubr.f32.gmra.mrb[0].mxu0 %v109
    %v460 = vpop.f32.mrb[0].mxu0
    %v461 = vadd.f32 %v342, %v460
    %v462 = vpop.f32.mrb[0].mxu0
    %463 = vmatprep.mubr.f32.mxu0 %v116
    %464 = vmatmul.mubr.f32.gmra.mrb[0].mxu0 %v115
    %v465 = vpop.f32.mrb[0].mxu0
    %v466 = vadd.f32 %v342, %v465
    %v467 = vpop.f32.mrb[0].mxu0
    %468 = vmatprep.mubr.f32.mxu0 %v122
    %469 = vmatmul.mubr.f32.gmra.mrb[0].mxu0 %v121
    %v470 = vpop.f32.mrb[0].mxu0
    %v471 = vadd.f32 %v342, %v470
    %v472 = vpop.f32.mrb[0].mxu0
    %473 = vmatprep.mubr.f32.mxu0 %v128
    %474 = vmatmul.mubr.f32.gmra.mrb[0].mxu0 %v127
    %v475 = vpop.f32.mrb[0].mxu0
    %v476 = vadd.f32 %v342, %v475
    %v477 = vpop.f32.mrb[0].mxu0
    %478 = vmatprep.mubr.f32.mxu0 %v134
    %479 = vmatmul.mubr.f32.gmra.mrb[0].mxu0 %v133
    %v480 = vpop.f32.mrb[0].mxu0
    %v481 = vadd.f32 %v342, %v480
    %v482 = vpop.f32.mrb[0].mxu0
    %483 = vmatprep.mubr.f32.mxu0 %v140
    %484 = vmatmul.mubr.f32.gmra.mrb[0].mxu0 %v139
    %v485 = vpop.f32.mrb[0].mxu0
    %v486 = vadd.f32 %v342, %v485
    %v487 = vpop.f32.mrb[0].mxu0
    %488 = vmatprep.mubr.f32.mxu0 %v146
    %489 = vmatmul.mubr.f32.gmra.mrb[0].mxu0 %v145
    %v490 = vpop.f32.mrb[0].mxu0
    %v491 = vadd.f32 %v342, %v490
    %v492 = vpop.f32.mrb[0].mxu0
    %493 = vmatprep.mubr.f32.mxu0 %v152
    %494 = vmatmul.mubr.f32.gmra.mrb[0].mxu0 %v151
    %v495 = vpop.f32.mrb[0].mxu0
    %v496 = vadd.f32 %v342, %v495
    %v497 = vpop.f32.mrb[0].mxu0
    %498 = vmatprep.mubr.f32.mxu0 %v158
    %499 = vmatmul.mubr.f32.gmra.mrb[0].mxu0 %v157
    %v500 = vpop.f32.mrb[0].mxu0
    %v501 = vadd.f32 %v342, %v500
    %v502 = vpop.f32.mrb[0].mxu0
    %503 = vmatprep.mubr.f32.mxu0 %v164
    %504 = vmatmul.mubr.f32.gmra.mrb[0].mxu0 %v163
    %v505 = vpop.f32.mrb[0].mxu0
    %v506 = vadd.f32 %v342, %v505
    %v507 = vpop.f32.mrb[0].mxu0
    %508 = vmatprep.mubr.f32.mxu0 %v170
    %509 = vmatmul.mubr.f32.gmra.mrb[0].mxu0 %v169
    %v510 = vpop.f32.mrb[0].mxu0
    %v511 = vadd.f32 %v342, %v510
    %v512 = vpop.f32.mrb[0].mxu0
    %513 = vmatprep.mubr.f32.mxu0 %v176
    %514 = vmatmul.mubr.f32.gmra.mrb[0].mxu0 %v175
    %v515 = vpop.f32.mrb[0].mxu0
    %v516 = vadd.f32 %v342, %v515
    %v517 = vpop.f32.mrb[0].mxu0
    %518 = vmatprep.mubr.f32.mxu0 %v182
    %519 = vmatmul.mubr.f32.gmra.mrb[0].mxu0 %v181
    %v520 = vpop.f32.mrb[0].mxu0
    %v521 = vadd.f32 %v342, %v520
    %v522 = vpop.f32.mrb[0].mxu0
    %523 = vmatprep.mubr.f32.mxu0 %v188
    %524 = vmatmul.mubr.f32.gmra.mrb[0].mxu0 %v187
    %v525 = vpop.f32.mrb[0].mxu0
    %v526 = vadd.f32 %v342, %v525
    %v527 = vpop.f32.mrb[0].mxu0
    %528 = vmatprep.mubr.f32.mxu0 %v194
    %529 = vmatmul.mubr.f32.gmra.mrb[0].mxu0 %v193
    %v530 = vpop.f32.mrb[0].mxu0
    %v531 = vadd.f32 %v342, %v530
    %v532 = vpop.f32.mrb[0].mxu0
    %533 = vmatprep.mubr.f32.mxu0 %v200
    %534 = vmatmul.mubr.f32.gmra.mrb[0].mxu0 %v199
    %v535 = vpop.f32.mrb[0].mxu0
    %v536 = vadd.f32 %v342, %v535
    %v537 = vpop.f32.mrb[0].mxu0
    %538 = vmatprep.mubr.f32.mxu0 %v206
    %539 = vmatmul.mubr.f32.gmra.mrb[0].mxu0 %v205
    %v540 = vpop.f32.mrb[0].mxu0
    %v541 = vadd.f32 %v342, %v540
    %v542 = vpop.f32.mrb[0].mxu0
    %543 = vmatprep.mubr.f32.mxu0 %v212
    %544 = vmatmul.mubr.f32.gmra.mrb[0].mxu0 %v211
    %v545 = vpop.f32.mrb[0].mxu0
    %v546 = vadd.f32 %v342, %v545
    %v547 = vpop.f32.mrb[0].mxu0
    %548 = vmatprep.mubr.f32.mxu0 %v218
    %549 = vmatmul.mubr.f32.gmra.mrb[0].mxu0 %v217
    %v550 = vpop.f32.mrb[0].mxu0
    %v551 = vadd.f32 %v342, %v550
    %v552 = vpop.f32.mrb[0].mxu0
    %553 = vmatprep.mubr.f32.mxu0 %v224
    %554 = vmatmul.mubr.f32.gmra.mrb[0].mxu0 %v223
    %v555 = vpop.f32.mrb[0].mxu0
    %v556 = vadd.f32 %v342, %v555
    %v557 = vpop.f32.mrb[0].mxu0
    %558 = vmatprep.mubr.f32.mxu0 %v230
    %559 = vmatmul.mubr.f32.gmra.mrb[0].mxu0 %v229
    %v560 = vpop.f32.mrb[0].mxu0
    %v561 = vadd.f32 %v342, %v560
    %v562 = vpop.f32.mrb[0].mxu0
    %563 = vmatprep.mubr.f32.mxu0 %v236
    %564 = vmatmul.mubr.f32.gmra.mrb[0].mxu0 %v235
    %v565 = vpop.f32.mrb[0].mxu0
    %v566 = vadd.f32 %v342, %v565
    %v567 = vpop.f32.mrb[0].mxu0
    %568 = vdwg.mxu0
    %569 = vmatprep.subr.mxu0 0.0
    %570 = vmatpush1.msra.mxu0 %v273
    %571 = vmatprep.subr.mxu0 0.0
    %572 = vmatpush1.msra.mxu0 %v274
    %573 = vmatprep.subr.mxu0 0.0
    %574 = vmatpush1.msra.mxu0 %v275
    %575 = vmatprep.subr.mxu0 0.0
    %576 = vmatpush1.msra.mxu0 %v276
    %577 = vmatprep.subr.mxu0 0.0
    %578 = vmatpush1.msra.mxu0 %v277
    %579 = vmatprep.subr.mxu0 0.0
    %580 = vmatpush1.msra.mxu0 %v278
    %581 = vmatprep.subr.mxu0 0.0
    %582 = vmatpush1.msra.mxu0 %v279
    %583 = vmatprep.subr.mxu0 0.0
    %584 = vmatpush1.msra.mxu0 %v280
    %585 = vmatprep.subr.mxu0 0.0
    %586 = vmatpush1.msra.mxu0 %v281
    %587 = vmatprep.subr.mxu0 0.0
    %588 = vmatpush1.msra.mxu0 %v282
    %589 = vmatprep.subr.mxu0 0.0
    %590 = vmatpush1.msra.mxu0 %v283
    %591 = vmatprep.subr.mxu0 0.0
    %592 = vmatpush1.msra.mxu0 %v284
    %593 = vmatprep.subr.mxu0 0.0
    %594 = vmatpush1.msra.mxu0 %v285
    %595 = vmatprep.subr.mxu0 0.0
    %596 = vmatpush1.msra.mxu0 %v286
    %597 = vmatprep.subr.mxu0 0.0
    %598 = vmatpush1.msra.mxu0 %v287
    %599 = vmatprep.subr.mxu0 0.0
    %600 = vmatpush1.msra.mxu0 %v288
    %601 = vmatprep.subr.mxu0 0.0
    %602 = vmatpush1.msra.mxu0 %v289
    %603 = vmatprep.subr.mxu0 0.0
    %604 = vmatpush1.msra.mxu0 %v290
    %605 = vmatprep.subr.mxu0 0.0
    %606 = vmatpush1.msra.mxu0 %v291
    %607 = vmatprep.subr.mxu0 0.0
    %608 = vmatpush1.msra.mxu0 %v292
    %609 = vmatprep.subr.mxu0 0.0
    %610 = vmatpush1.msra.mxu0 %v293
    %611 = vmatprep.subr.mxu0 0.0
    %612 = vmatpush1.msra.mxu0 %v294
    %613 = vmatprep.subr.mxu0 0.0
    %614 = vmatpush1.msra.mxu0 %v295
    %615 = vmatprep.subr.mxu0 0.0
    %616 = vmatpush1.msra.mxu0 %v296
    %617 = vmatprep.subr.mxu0 0.0
    %618 = vmatpush1.msra.mxu0 %v297
    %619 = vmatprep.subr.mxu0 0.0
    %620 = vmatpush1.msra.mxu0 %v298
    %621 = vmatprep.subr.mxu0 0.0
    %622 = vmatpush1.msra.mxu0 %v299
    %623 = vmatprep.subr.mxu0 0.0
    %624 = vmatpush1.msra.mxu0 %v300
    %625 = vmatprep.subr.mxu0 0.0
    %626 = vmatpush1.msra.mxu0 %v301
    %627 = vmatprep.subr.mxu0 0.0
    %628 = vmatpush1.msra.mxu0 %v302
    %629 = vmatprep.subr.mxu0 0.0
    %630 = vmatpush1.msra.mxu0 %v303
    %631 = vmatprep.subr.mxu0 0.0
    %632 = vmatpush1.msra.mxu0 %v304
    %633 = vmatprep.mubr.f32.mxu0 %v52
    %634 = vmatmul.mubr.f32.gmra.mrb[0].mxu0 %v51
    %v635 = vpop.f32.mrb[0].mxu0
    %v636 = vadd.f32 %v411, %v635
    %v637 = vpop.f32.mrb[0].mxu0
    %638 = vmatprep.mubr.f32.mxu0 %v58
    %639 = vmatmul.mubr.f32.gmra.mrb[0].mxu0 %v57
    %v640 = vpop.f32.mrb[0].mxu0
    %v641 = vadd.f32 %v416, %v640
    %v642 = vpop.f32.mrb[0].mxu0
    %643 = vmatprep.mubr.f32.mxu0 %v64
    %644 = vmatmul.mubr.f32.gmra.mrb[0].mxu0 %v63
    %v645 = vpop.f32.mrb[0].mxu0
    %v646 = vadd.f32 %v421, %v645
    %v647 = vpop.f32.mrb[0].mxu0
    %648 = vmatprep.mubr.f32.mxu0 %v70
    %649 = vmatmul.mubr.f32.gmra.mrb[0].mxu0 %v69
    %v650 = vpop.f32.mrb[0].mxu0
    %v651 = vadd.f32 %v426, %v650
    %v652 = vpop.f32.mrb[0].mxu0
    %653 = vmatprep.mubr.f32.mxu0 %v76
    %654 = vmatmul.mubr.f32.gmra.mrb[0].mxu0 %v75
    %v655 = vpop.f32.mrb[0].mxu0
    %v656 = vadd.f32 %v431, %v655
    %v657 = vpop.f32.mrb[0].mxu0
    %658 = vmatprep.mubr.f32.mxu0 %v82
    %659 = vmatmul.mubr.f32.gmra.mrb[0].mxu0 %v81
    %v660 = vpop.f32.mrb[0].mxu0
    %v661 = vadd.f32 %v436, %v660
    %v662 = vpop.f32.mrb[0].mxu0
    %663 = vmatprep.mubr.f32.mxu0 %v88
    %664 = vmatmul.mubr.f32.gmra.mrb[0].mxu0 %v87
    %v665 = vpop.f32.mrb[0].mxu0
    %v666 = vadd.f32 %v441, %v665
    %v667 = vpop.f32.mrb[0].mxu0
    %668 = vmatprep.mubr.f32.mxu0 %v94
    %669 = vmatmul.mubr.f32.gmra.mrb[0].mxu0 %v93
    %v670 = vpop.f32.mrb[0].mxu0
    %v671 = vadd.f32 %v446, %v670
    %v672 = vpop.f32.mrb[0].mxu0
    %673 = vmatprep.mubr.f32.mxu0 %v100
    %674 = vmatmul.mubr.f32.gmra.mrb[0].mxu0 %v99
    %v675 = vpop.f32.mrb[0].mxu0
    %v676 = vadd.f32 %v451, %v675
    %v677 = vpop.f32.mrb[0].mxu0
    %678 = vmatprep.mubr.f32.mxu0 %v106
    %679 = vmatmul.mubr.f32.gmra.mrb[0].mxu0 %v105
    %v680 = vpop.f32.mrb[0].mxu0
    %v681 = vadd.f32 %v456, %v680
    %v682 = vpop.f32.mrb[0].mxu0
    %683 = vmatprep.mubr.f32.mxu0 %v112
    %684 = vmatmul.mubr.f32.gmra.mrb[0].mxu0 %v111
    %v685 = vpop.f32.mrb[0].mxu0
    %v686 = vadd.f32 %v461, %v685
    %v687 = vpop.f32.mrb[0].mxu0
    %688 = vmatprep.mubr.f32.mxu0 %v118
    %689 = vmatmul.mubr.f32.gmra.mrb[0].mxu0 %v117
    %v690 = vpop.f32.mrb[0].mxu0
    %v691 = vadd.f32 %v466, %v690
    %v692 = vpop.f32.mrb[0].mxu0
    %693 = vmatprep.mubr.f32.mxu0 %v124
    %694 = vmatmul.mubr.f32.gmra.mrb[0].mxu0 %v123
    %v695 = vpop.f32.mrb[0].mxu0
    %v696 = vadd.f32 %v471, %v695
    %v697 = vpop.f32.mrb[0].mxu0
    %698 = vmatprep.mubr.f32.mxu0 %v130
    %699 = vmatmul.mubr.f32.gmra.mrb[0].mxu0 %v129
    %v700 = vpop.f32.mrb[0].mxu0
    %v701 = vadd.f32 %v476, %v700
    %v702 = vpop.f32.mrb[0].mxu0
    %703 = vmatprep.mubr.f32.mxu0 %v136
    %704 = vmatmul.mubr.f32.gmra.mrb[0].mxu0 %v135
    %v705 = vpop.f32.mrb[0].mxu0
    %v706 = vadd.f32 %v481, %v705
    %v707 = vpop.f32.mrb[0].mxu0
    %708 = vmatprep.mubr.f32.mxu0 %v142
    %709 = vmatmul.mubr.f32.gmra.mrb[0].mxu0 %v141
    %v710 = vpop.f32.mrb[0].mxu0
    %v711 = vadd.f32 %v486, %v710
    %v712 = vpop.f32.mrb[0].mxu0
    %713 = vmatprep.mubr.f32.mxu0 %v148
    %714 = vmatmul.mubr.f32.gmra.mrb[0].mxu0 %v147
    %v715 = vpop.f32.mrb[0].mxu0
    %v716 = vadd.f32 %v491, %v715
    %v717 = vpop.f32.mrb[0].mxu0
    %718 = vmatprep.mubr.f32.mxu0 %v154
    %719 = vmatmul.mubr.f32.gmra.mrb[0].mxu0 %v153
    %v720 = vpop.f32.mrb[0].mxu0
    %v721 = vadd.f32 %v496, %v720
    %v722 = vpop.f32.mrb[0].mxu0
    %723 = vmatprep.mubr.f32.mxu0 %v160
    %724 = vmatmul.mubr.f32.gmra.mrb[0].mxu0 %v159
    %v725 = vpop.f32.mrb[0].mxu0
    %v726 = vadd.f32 %v501, %v725
    %v727 = vpop.f32.mrb[0].mxu0
    %728 = vmatprep.mubr.f32.mxu0 %v166
    %729 = vmatmul.mubr.f32.gmra.mrb[0].mxu0 %v165
    %v730 = vpop.f32.mrb[0].mxu0
    %v731 = vadd.f32 %v506, %v730
    %v732 = vpop.f32.mrb[0].mxu0
    %733 = vmatprep.mubr.f32.mxu0 %v172
    %734 = vmatmul.mubr.f32.gmra.mrb[0].mxu0 %v171
    %v735 = vpop.f32.mrb[0].mxu0
    %v736 = vadd.f32 %v511, %v735
    %v737 = vpop.f32.mrb[0].mxu0
    %738 = vmatprep.mubr.f32.mxu0 %v178
    %739 = vmatmul.mubr.f32.gmra.mrb[0].mxu0 %v177
    %v740 = vpop.f32.mrb[0].mxu0
    %v741 = vadd.f32 %v516, %v740
    %v742 = vpop.f32.mrb[0].mxu0
    %743 = vmatprep.mubr.f32.mxu0 %v184
    %744 = vmatmul.mubr.f32.gmra.mrb[0].mxu0 %v183
    %v745 = vpop.f32.mrb[0].mxu0
    %v746 = vadd.f32 %v521, %v745
    %v747 = vpop.f32.mrb[0].mxu0
    %748 = vmatprep.mubr.f32.mxu0 %v190
    %749 = vmatmul.mubr.f32.gmra.mrb[0].mxu0 %v189
    %v750 = vpop.f32.mrb[0].mxu0
    %v751 = vadd.f32 %v526, %v750
    %v752 = vpop.f32.mrb[0].mxu0
    %753 = vmatprep.mubr.f32.mxu0 %v196
    %754 = vmatmul.mubr.f32.gmra.mrb[0].mxu0 %v195
    %v755 = vpop.f32.mrb[0].mxu0
    %v756 = vadd.f32 %v531, %v755
    %v757 = vpop.f32.mrb[0].mxu0
    %758 = vmatprep.mubr.f32.mxu0 %v202
    %759 = vmatmul.mubr.f32.gmra.mrb[0].mxu0 %v201
    %v760 = vpop.f32.mrb[0].mxu0
    %v761 = vadd.f32 %v536, %v760
    %v762 = vpop.f32.mrb[0].mxu0
    %763 = vmatprep.mubr.f32.mxu0 %v208
    %764 = vmatmul.mubr.f32.gmra.mrb[0].mxu0 %v207
    %v765 = vpop.f32.mrb[0].mxu0
    %v766 = vadd.f32 %v541, %v765
    %v767 = vpop.f32.mrb[0].mxu0
    %768 = vmatprep.mubr.f32.mxu0 %v214
    %769 = vmatmul.mubr.f32.gmra.mrb[0].mxu0 %v213
    %v770 = vpop.f32.mrb[0].mxu0
    %v771 = vadd.f32 %v546, %v770
    %v772 = vpop.f32.mrb[0].mxu0
    %773 = vmatprep.mubr.f32.mxu0 %v220
    %774 = vmatmul.mubr.f32.gmra.mrb[0].mxu0 %v219
    %v775 = vpop.f32.mrb[0].mxu0
    %v776 = vadd.f32 %v551, %v775
    %v777 = vpop.f32.mrb[0].mxu0
    %778 = vmatprep.mubr.f32.mxu0 %v226
    %779 = vmatmul.mubr.f32.gmra.mrb[0].mxu0 %v225
    %v780 = vpop.f32.mrb[0].mxu0
    %v781 = vadd.f32 %v556, %v780
    %v782 = vpop.f32.mrb[0].mxu0
    %783 = vmatprep.mubr.f32.mxu0 %v232
    %784 = vmatmul.mubr.f32.gmra.mrb[0].mxu0 %v231
    %v785 = vpop.f32.mrb[0].mxu0
    %v786 = vadd.f32 %v561, %v785
    %v787 = vpop.f32.mrb[0].mxu0
    %788 = vmatprep.mubr.f32.mxu0 %v238
    %789 = vmatmul.mubr.f32.gmra.mrb[0].mxu0 %v237
    %v790 = vpop.f32.mrb[0].mxu0
    %v791 = vadd.f32 %v566, %v790
    %v792 = vpop.f32.mrb[0].mxu0
    %793 = vdwg.mxu0
    %794 = vmatprep.subr.mxu0 0.0
    %795 = vmatpush1.msra.mxu0 %v305
    %796 = vmatprep.subr.mxu0 0.0
    %797 = vmatpush1.msra.mxu0 %v306
    %798 = vmatprep.subr.mxu0 0.0
    %799 = vmatpush1.msra.mxu0 %v307
    %800 = vmatprep.subr.mxu0 0.0
    %801 = vmatpush1.msra.mxu0 %v308
    %802 = vmatprep.subr.mxu0 0.0
    %803 = vmatpush1.msra.mxu0 %v309
    %804 = vmatprep.subr.mxu0 0.0
    %805 = vmatpush1.msra.mxu0 %v310
    %806 = vmatprep.subr.mxu0 0.0
    %807 = vmatpush1.msra.mxu0 %v311
    %808 = vmatprep.subr.mxu0 0.0
    %809 = vmatpush1.msra.mxu0 %v312
    %810 = vmatprep.subr.mxu0 0.0
    %811 = vmatpush1.msra.mxu0 %v313
    %812 = vmatprep.subr.mxu0 0.0
    %813 = vmatpush1.msra.mxu0 %v314
    %814 = vmatprep.subr.mxu0 0.0
    %815 = vmatpush1.msra.mxu0 %v315
    %816 = vmatprep.subr.mxu0 0.0
    %817 = vmatpush1.msra.mxu0 %v316
    %818 = vmatprep.subr.mxu0 0.0
    %819 = vmatpush1.msra.mxu0 %v317
    %820 = vmatprep.subr.mxu0 0.0
    %821 = vmatpush1.msra.mxu0 %v318
    %822 = vmatprep.subr.mxu0 0.0
    %823 = vmatpush1.msra.mxu0 %v319
    %824 = vmatprep.subr.mxu0 0.0
    %825 = vmatpush1.msra.mxu0 %v320
    %826 = vmatprep.subr.mxu0 0.0
    %827 = vmatpush1.msra.mxu0 %v321
    %828 = vmatprep.subr.mxu0 0.0
    %829 = vmatpush1.msra.mxu0 %v322
    %830 = vmatprep.subr.mxu0 0.0
    %831 = vmatpush1.msra.mxu0 %v323
    %832 = vmatprep.subr.mxu0 0.0
    %833 = vmatpush1.msra.mxu0 %v324
    %834 = vmatprep.subr.mxu0 0.0
    %835 = vmatpush1.msra.mxu0 %v325
    %836 = vmatprep.subr.mxu0 0.0
    %837 = vmatpush1.msra.mxu0 %v326
    %838 = vmatprep.subr.mxu0 0.0
    %839 = vmatpush1.msra.mxu0 %v327
    %840 = vmatprep.subr.mxu0 0.0
    %841 = vmatpush1.msra.mxu0 %v328
    %842 = vmatprep.subr.mxu0 0.0
    %843 = vmatpush1.msra.mxu0 %v329
    %844 = vmatprep.subr.mxu0 0.0
    %845 = vmatpush1.msra.mxu0 %v330
    %846 = vmatprep.subr.mxu0 0.0
    %847 = vmatpush1.msra.mxu0 %v331
    %848 = vmatprep.subr.mxu0 0.0
    %849 = vmatpush1.msra.mxu0 %v332
    %850 = vmatprep.subr.mxu0 0.0
    %851 = vmatpush1.msra.mxu0 %v333
    %852 = vmatprep.subr.mxu0 0.0
    %853 = vmatpush1.msra.mxu0 %v334
    %854 = vmatprep.subr.mxu0 0.0
    %855 = vmatpush1.msra.mxu0 %v335
    %856 = vmatprep.subr.mxu0 0.0
    %857 = vmatpush1.msra.mxu0 %v336
    %858 = vmatprep.mubr.f32.mxu0 %v54
    %859 = vmatmul.mubr.f32.gmra.mrb[0].mxu0 %v53
    %v860 = vpop.f32.mrb[0].mxu0
    %v861 = vadd.f32 %v636, %v860
    %v862 = vpop.f32.mrb[0].mxu0
    %863 = vmatprep.mubr.f32.mxu0 %v60
    %864 = vmatmul.mubr.f32.gmra.mrb[0].mxu0 %v59
    %v865 = vpop.f32.mrb[0].mxu0
    %v866 = vadd.f32 %v641, %v865
    %v867 = vpop.f32.mrb[0].mxu0
    %868 = vmatprep.mubr.f32.mxu0 %v66
    %869 = vmatmul.mubr.f32.gmra.mrb[0].mxu0 %v65
    %v870 = vpop.f32.mrb[0].mxu0
    %v871 = vadd.f32 %v646, %v870
    %v872 = vpop.f32.mrb[0].mxu0
    %873 = vmatprep.mubr.f32.mxu0 %v72
    %874 = vmatmul.mubr.f32.gmra.mrb[0].mxu0 %v71
    %v875 = vpop.f32.mrb[0].mxu0
    %v876 = vadd.f32 %v651, %v875
    %v877 = vpop.f32.mrb[0].mxu0
    %878 = vmatprep.mubr.f32.mxu0 %v78
    %879 = vmatmul.mubr.f32.gmra.mrb[0].mxu0 %v77
    %v880 = vpop.f32.mrb[0].mxu0
    %v881 = vadd.f32 %v656, %v880
    %v882 = vpop.f32.mrb[0].mxu0
    %883 = vmatprep.mubr.f32.mxu0 %v84
    %884 = vmatmul.mubr.f32.gmra.mrb[0].mxu0 %v83
    %v885 = vpop.f32.mrb[0].mxu0
    %v886 = vadd.f32 %v661, %v885
    %v887 = vpop.f32.mrb[0].mxu0
    %888 = vmatprep.mubr.f32.mxu0 %v90
    %889 = vmatmul.mubr.f32.gmra.mrb[0].mxu0 %v89
    %v890 = vpop.f32.mrb[0].mxu0
    %v891 = vadd.f32 %v666, %v890
    %v892 = vpop.f32.mrb[0].mxu0
    %893 = vmatprep.mubr.f32.mxu0 %v96
    %894 = vmatmul.mubr.f32.gmra.mrb[0].mxu0 %v95
    %v895 = vpop.f32.mrb[0].mxu0
    %v896 = vadd.f32 %v671, %v895
    %v897 = vpop.f32.mrb[0].mxu0
    %898 = vmatprep.mubr.f32.mxu0 %v102
    %899 = vmatmul.mubr.f32.gmra.mrb[0].mxu0 %v101
    %v900 = vpop.f32.mrb[0].mxu0
    %v901 = vadd.f32 %v676, %v900
    %v902 = vpop.f32.mrb[0].mxu0
    %903 = vmatprep.mubr.f32.mxu0 %v108
    %904 = vmatmul.mubr.f32.gmra.mrb[0].mxu0 %v107
    %v905 = vpop.f32.mrb[0].mxu0
    %v906 = vadd.f32 %v681, %v905
    %v907 = vpop.f32.mrb[0].mxu0
    %908 = vmatprep.mubr.f32.mxu0 %v114
    %909 = vmatmul.mubr.f32.gmra.mrb[0].mxu0 %v113
    %v910 = vpop.f32.mrb[0].mxu0
    %v911 = vadd.f32 %v686, %v910
    %v912 = vpop.f32.mrb[0].mxu0
    %913 = vmatprep.mubr.f32.mxu0 %v120
    %914 = vmatmul.mubr.f32.gmra.mrb[0].mxu0 %v119
    %v915 = vpop.f32.mrb[0].mxu0
    %v916 = vadd.f32 %v691, %v915
    %v917 = vpop.f32.mrb[0].mxu0
    %918 = vmatprep.mubr.f32.mxu0 %v126
    %919 = vmatmul.mubr.f32.gmra.mrb[0].mxu0 %v125
    %v920 = vpop.f32.mrb[0].mxu0
    %v921 = vadd.f32 %v696, %v920
    %v922 = vpop.f32.mrb[0].mxu0
    %923 = vmatprep.mubr.f32.mxu0 %v132
    %924 = vmatmul.mubr.f32.gmra.mrb[0].mxu0 %v131
    %v925 = vpop.f32.mrb[0].mxu0
    %v926 = vadd.f32 %v701, %v925
    %v927 = vpop.f32.mrb[0].mxu0
    %928 = vmatprep.mubr.f32.mxu0 %v138
    %929 = vmatmul.mubr.f32.gmra.mrb[0].mxu0 %v137
    %v930 = vpop.f32.mrb[0].mxu0
    %v931 = vadd.f32 %v706, %v930
    %v932 = vpop.f32.mrb[0].mxu0
    %933 = vmatprep.mubr.f32.mxu0 %v144
    %934 = vmatmul.mubr.f32.gmra.mrb[0].mxu0 %v143
    %v935 = vpop.f32.mrb[0].mxu0
    %v936 = vadd.f32 %v711, %v935
    %v937 = vpop.f32.mrb[0].mxu0
    %938 = vmatprep.mubr.f32.mxu0 %v150
    %939 = vmatmul.mubr.f32.gmra.mrb[0].mxu0 %v149
    %v940 = vpop.f32.mrb[0].mxu0
    %v941 = vadd.f32 %v716, %v940
    %v942 = vpop.f32.mrb[0].mxu0
    %943 = vmatprep.mubr.f32.mxu0 %v156
    %944 = vmatmul.mubr.f32.gmra.mrb[0].mxu0 %v155
    %v945 = vpop.f32.mrb[0].mxu0
    %v946 = vadd.f32 %v721, %v945
    %v947 = vpop.f32.mrb[0].mxu0
    %948 = vmatprep.mubr.f32.mxu0 %v162
    %949 = vmatmul.mubr.f32.gmra.mrb[0].mxu0 %v161
    %v950 = vpop.f32.mrb[0].mxu0
    %v951 = vadd.f32 %v726, %v950
    %v952 = vpop.f32.mrb[0].mxu0
    %953 = vmatprep.mubr.f32.mxu0 %v168
    %954 = vmatmul.mubr.f32.gmra.mrb[0].mxu0 %v167
    %v955 = vpop.f32.mrb[0].mxu0
    %v956 = vadd.f32 %v731, %v955
    %v957 = vpop.f32.mrb[0].mxu0
    %958 = vmatprep.mubr.f32.mxu0 %v174
    %959 = vmatmul.mubr.f32.gmra.mrb[0].mxu0 %v173
    %v960 = vpop.f32.mrb[0].mxu0
    %v961 = vadd.f32 %v736, %v960
    %v962 = vpop.f32.mrb[0].mxu0
    %963 = vmatprep.mubr.f32.mxu0 %v180
    %964 = vmatmul.mubr.f32.gmra.mrb[0].mxu0 %v179
    %v965 = vpop.f32.mrb[0].mxu0
    %v966 = vadd.f32 %v741, %v965
    %v967 = vpop.f32.mrb[0].mxu0
    %968 = vmatprep.mubr.f32.mxu0 %v186
    %969 = vmatmul.mubr.f32.gmra.mrb[0].mxu0 %v185
    %v970 = vpop.f32.mrb[0].mxu0
    %v971 = vadd.f32 %v746, %v970
    %v972 = vpop.f32.mrb[0].mxu0
    %973 = vmatprep.mubr.f32.mxu0 %v192
    %974 = vmatmul.mubr.f32.gmra.mrb[0].mxu0 %v191
    %v975 = vpop.f32.mrb[0].mxu0
    %v976 = vadd.f32 %v751, %v975
    %v977 = vpop.f32.mrb[0].mxu0
    %978 = vmatprep.mubr.f32.mxu0 %v198
    %979 = vmatmul.mubr.f32.gmra.mrb[0].mxu0 %v197
    %v980 = vpop.f32.mrb[0].mxu0
    %v981 = vadd.f32 %v756, %v980
    %v982 = vpop.f32.mrb[0].mxu0
    %983 = vmatprep.mubr.f32.mxu0 %v204
    %984 = vmatmul.mubr.f32.gmra.mrb[0].mxu0 %v203
    %v985 = vpop.f32.mrb[0].mxu0
    %v986 = vadd.f32 %v761, %v985
    %v987 = vpop.f32.mrb[0].mxu0
    %988 = vmatprep.mubr.f32.mxu0 %v210
    %989 = vmatmul.mubr.f32.gmra.mrb[0].mxu0 %v209
    %v990 = vpop.f32.mrb[0].mxu0
    %v991 = vadd.f32 %v766, %v990
    %v992 = vpop.f32.mrb[0].mxu0
    %993 = vmatprep.mubr.f32.mxu0 %v216
    %994 = vmatmul.mubr.f32.gmra.mrb[0].mxu0 %v215
    %v995 = vpop.f32.mrb[0].mxu0
    %v996 = vadd.f32 %v771, %v995
    %v997 = vpop.f32.mrb[0].mxu0
    %998 = vmatprep.mubr.f32.mxu0 %v222
    %999 = vmatmul.mubr.f32.gmra.mrb[0].mxu0 %v221
    %v1000 = vpop.f32.mrb[0].mxu0
    %v1001 = vadd.f32 %v776, %v1000
    %v1002 = vpop.f32.mrb[0].mxu0
    %1003 = vmatprep.mubr.f32.mxu0 %v228
    %1004 = vmatmul.mubr.f32.gmra.mrb[0].mxu0 %v227
    %v1005 = vpop.f32.mrb[0].mxu0
    %v1006 = vadd.f32 %v781, %v1005
    %v1007 = vpop.f32.mrb[0].mxu0
    %1008 = vmatprep.mubr.f32.mxu0 %v234
    %1009 = vmatmul.mubr.f32.gmra.mrb[0].mxu0 %v233
    %v1010 = vpop.f32.mrb[0].mxu0
    %v1011 = vadd.f32 %v786, %v1010
    %v1012 = vpop.f32.mrb[0].mxu0
    %1013 = vmatprep.mubr.f32.mxu0 %v240
    %1014 = vmatmul.mubr.f32.gmra.mrb[0].mxu0 %v239
    %v1015 = vpop.f32.mrb[0].mxu0
    %v1016 = vadd.f32 %v791, %v1015
    %v1017 = vpop.f32.mrb[0].mxu0
    %1018 = vdwg.mxu0
    %v1019 = vmax.f32 %v861, 0.0
    %v1020 = vmax.f32 %v866, 0.0
    %v1021 = vmax.f32 %v871, 0.0
    %v1022 = vmax.f32 %v876, 0.0
    %v1023 = vmax.f32 %v881, 0.0
    %v1024 = vmax.f32 %v886, 0.0
    %v1025 = vmax.f32 %v891, 0.0
    %v1026 = vmax.f32 %v896, 0.0
    %v1027 = vmax.f32 %v901, 0.0
    %v1028 = vmax.f32 %v906, 0.0
    %v1029 = vmax.f32 %v911, 0.0
    %v1030 = vmax.f32 %v916, 0.0
    %v1031 = vmax.f32 %v921, 0.0
    %v1032 = vmax.f32 %v926, 0.0
    %v1033 = vmax.f32 %v931, 0.0
    %v1034 = vmax.f32 %v936, 0.0
    %v1035 = vmax.f32 %v941, 0.0
    %v1036 = vmax.f32 %v946, 0.0
    %v1037 = vmax.f32 %v951, 0.0
    %v1038 = vmax.f32 %v956, 0.0
    %v1039 = vmax.f32 %v961, 0.0
    %v1040 = vmax.f32 %v966, 0.0
    %v1041 = vmax.f32 %v971, 0.0
    %v1042 = vmax.f32 %v976, 0.0
    %v1043 = vmax.f32 %v981, 0.0
    %v1044 = vmax.f32 %v986, 0.0
    %v1045 = vmax.f32 %v991, 0.0
    %v1046 = vmax.f32 %v996, 0.0
    %v1047 = vmax.f32 %v1001, 0.0
    %v1048 = vmax.f32 %v1006, 0.0
    %v1049 = vmax.f32 %v1011, 0.0
    %v1050 = vmax.f32 %v1016, 0.0
    %v1051 = vld [vmem:[%s3] sm:$0x1]
    %v1053 = vlaneseq
    %v1054 = vshrl.u32 %v1053, 7
    %v1055 = vsub.s32 0, %v1054
    %v1056 = vrot.slane %v1051, %v1055
    %v1058 = vmul.f32 %v1019, %v1056
    %v1059 = vmul.f32 %v1020, %v1056
    %v1060 = vmul.f32 %v1021, %v1056
    %v1061 = vmul.f32 %v1022, %v1056
    %v1062 = vmul.f32 %v1023, %v1056
    %v1063 = vmul.f32 %v1024, %v1056
    %v1064 = vmul.f32 %v1025, %v1056
    %v1065 = vmul.f32 %v1026, %v1056
    %v1066 = vmul.f32 %v1027, %v1056
    %v1067 = vmul.f32 %v1028, %v1056
    %v1068 = vmul.f32 %v1029, %v1056
    %v1069 = vmul.f32 %v1030, %v1056
    %v1070 = vmul.f32 %v1031, %v1056
    %v1071 = vmul.f32 %v1032, %v1056
    %v1072 = vmul.f32 %v1033, %v1056
    %v1073 = vmul.f32 %v1034, %v1056
    %v1074 = vmul.f32 %v1035, %v1056
    %v1075 = vmul.f32 %v1036, %v1056
    %v1076 = vmul.f32 %v1037, %v1056
    %v1077 = vmul.f32 %v1038, %v1056
    %v1078 = vmul.f32 %v1039, %v1056
    %v1079 = vmul.f32 %v1040, %v1056
    %v1080 = vmul.f32 %v1041, %v1056
    %v1081 = vmul.f32 %v1042, %v1056
    %v1082 = vmul.f32 %v1043, %v1056
    %v1083 = vmul.f32 %v1044, %v1056
    %v1084 = vmul.f32 %v1045, %v1056
    %v1085 = vmul.f32 %v1046, %v1056
    %v1086 = vmul.f32 %v1047, %v1056
    %v1087 = vmul.f32 %v1048, %v1056
    %v1088 = vmul.f32 %v1049, %v1056
    %v1089 = vmul.f32 %v1050, %v1056
    %1090 = vadd.xlane.f32.xlu0 %v1058
    %v1091 = vpop.xlane.xlu0 %1090
    %1092 = vadd.xlane.f32.xlu0 %v1059
    %v1093 = vpop.xlane.xlu0 %1092
    %1094 = vadd.xlane.f32.xlu0 %v1060
    %v1095 = vpop.xlane.xlu0 %1094
    %1096 = vadd.xlane.f32.xlu0 %v1061
    %v1097 = vpop.xlane.xlu0 %1096
    %1098 = vadd.xlane.f32.xlu0 %v1062
    %v1099 = vpop.xlane.xlu0 %1098
    %1100 = vadd.xlane.f32.xlu0 %v1063
    %v1101 = vpop.xlane.xlu0 %1100
    %1102 = vadd.xlane.f32.xlu0 %v1064
    %v1103 = vpop.xlane.xlu0 %1102
    %1104 = vadd.xlane.f32.xlu0 %v1065
    %v1105 = vpop.xlane.xlu0 %1104
    %1106 = vadd.xlane.f32.xlu0 %v1066
    %v1107 = vpop.xlane.xlu0 %1106
    %1108 = vadd.xlane.f32.xlu0 %v1067
    %v1109 = vpop.xlane.xlu0 %1108
    %1110 = vadd.xlane.f32.xlu0 %v1068
    %v1111 = vpop.xlane.xlu0 %1110
    %1112 = vadd.xlane.f32.xlu0 %v1069
    %v1113 = vpop.xlane.xlu0 %1112
    %1114 = vadd.xlane.f32.xlu0 %v1070
    %v1115 = vpop.xlane.xlu0 %1114
    %1116 = vadd.xlane.f32.xlu0 %v1071
    %v1117 = vpop.xlane.xlu0 %1116
    %1118 = vadd.xlane.f32.xlu0 %v1072
    %v1119 = vpop.xlane.xlu0 %1118
    %1120 = vadd.xlane.f32.xlu0 %v1073
    %v1121 = vpop.xlane.xlu0 %1120
    %1122 = vadd.xlane.f32.xlu0 %v1074
    %v1123 = vpop.xlane.xlu0 %1122
    %1124 = vadd.xlane.f32.xlu0 %v1075
    %v1125 = vpop.xlane.xlu0 %1124
    %1126 = vadd.xlane.f32.xlu0 %v1076
    %v1127 = vpop.xlane.xlu0 %1126
    %1128 = vadd.xlane.f32.xlu0 %v1077
    %v1129 = vpop.xlane.xlu0 %1128
    %1130 = vadd.xlane.f32.xlu0 %v1078
    %v1131 = vpop.xlane.xlu0 %1130
    %1132 = vadd.xlane.f32.xlu0 %v1079
    %v1133 = vpop.xlane.xlu0 %1132
    %1134 = vadd.xlane.f32.xlu0 %v1080
    %v1135 = vpop.xlane.xlu0 %1134
    %1136 = vadd.xlane.f32.xlu0 %v1081
    %v1137 = vpop.xlane.xlu0 %1136
    %1138 = vadd.xlane.f32.xlu0 %v1082
    %v1139 = vpop.xlane.xlu0 %1138
    %1140 = vadd.xlane.f32.xlu0 %v1083
    %v1141 = vpop.xlane.xlu0 %1140
    %1142 = vadd.xlane.f32.xlu0 %v1084
    %v1143 = vpop.xlane.xlu0 %1142
    %1144 = vadd.xlane.f32.xlu0 %v1085
    %v1145 = vpop.xlane.xlu0 %1144
    %1146 = vadd.xlane.f32.xlu0 %v1086
    %v1147 = vpop.xlane.xlu0 %1146
    %1148 = vadd.xlane.f32.xlu0 %v1087
    %v1149 = vpop.xlane.xlu0 %1148
    %1150 = vadd.xlane.f32.xlu0 %v1088
    %v1151 = vpop.xlane.xlu0 %1150
    %1152 = vadd.xlane.f32.xlu0 %v1089
    %v1153 = vpop.xlane.xlu0 %1152
    %s1154 = sld [smem:[#allocation2]]
    %v1155 = vstv %s1154
    %v1156 = vadd.f32 %v1091, %v1155
    %v1157 = vadd.f32 %v1093, %v1155
    %v1158 = vadd.f32 %v1095, %v1155
    %v1159 = vadd.f32 %v1097, %v1155
    %v1160 = vadd.f32 %v1099, %v1155
    %v1161 = vadd.f32 %v1101, %v1155
    %v1162 = vadd.f32 %v1103, %v1155
    %v1163 = vadd.f32 %v1105, %v1155
    %v1164 = vadd.f32 %v1107, %v1155
    %v1165 = vadd.f32 %v1109, %v1155
    %v1166 = vadd.f32 %v1111, %v1155
    %v1167 = vadd.f32 %v1113, %v1155
    %v1168 = vadd.f32 %v1115, %v1155
    %v1169 = vadd.f32 %v1117, %v1155
    %v1170 = vadd.f32 %v1119, %v1155
    %v1171 = vadd.f32 %v1121, %v1155
    %v1172 = vadd.f32 %v1123, %v1155
    %v1173 = vadd.f32 %v1125, %v1155
    %v1174 = vadd.f32 %v1127, %v1155
    %v1175 = vadd.f32 %v1129, %v1155
    %v1176 = vadd.f32 %v1131, %v1155
    %v1177 = vadd.f32 %v1133, %v1155
    %v1178 = vadd.f32 %v1135, %v1155
    %v1179 = vadd.f32 %v1137, %v1155
    %v1180 = vadd.f32 %v1139, %v1155
    %v1181 = vadd.f32 %v1141, %v1155
    %v1182 = vadd.f32 %v1143, %v1155
    %v1183 = vadd.f32 %v1145, %v1155
    %v1184 = vadd.f32 %v1147, %v1155
    %v1185 = vadd.f32 %v1149, %v1155
    %v1186 = vadd.f32 %v1151, %v1155
    %v1187 = vadd.f32 %v1153, %v1155
    %v1188 = vxor.u32 %v1156, 2147483648
    %v1189 = vxor.u32 %v1157, 2147483648
    %v1190 = vxor.u32 %v1158, 2147483648
    %v1191 = vxor.u32 %v1159, 2147483648
    %v1192 = vxor.u32 %v1160, 2147483648
    %v1193 = vxor.u32 %v1161, 2147483648
    %v1194 = vxor.u32 %v1162, 2147483648
    %v1195 = vxor.u32 %v1163, 2147483648
    %v1196 = vxor.u32 %v1164, 2147483648
    %v1197 = vxor.u32 %v1165, 2147483648
    %v1198 = vxor.u32 %v1166, 2147483648
    %v1199 = vxor.u32 %v1167, 2147483648
    %v1200 = vxor.u32 %v1168, 2147483648
    %v1201 = vxor.u32 %v1169, 2147483648
    %v1202 = vxor.u32 %v1170, 2147483648
    %v1203 = vxor.u32 %v1171, 2147483648
    %v1204 = vxor.u32 %v1172, 2147483648
    %v1205 = vxor.u32 %v1173, 2147483648
    %v1206 = vxor.u32 %v1174, 2147483648
    %v1207 = vxor.u32 %v1175, 2147483648
    %v1208 = vxor.u32 %v1176, 2147483648
    %v1209 = vxor.u32 %v1177, 2147483648
    %v1210 = vxor.u32 %v1178, 2147483648
    %v1211 = vxor.u32 %v1179, 2147483648
    %v1212 = vxor.u32 %v1180, 2147483648
    %v1213 = vxor.u32 %v1181, 2147483648
    %v1214 = vxor.u32 %v1182, 2147483648
    %v1215 = vxor.u32 %v1183, 2147483648
    %v1216 = vxor.u32 %v1184, 2147483648
    %v1217 = vxor.u32 %v1185, 2147483648
    %v1218 = vxor.u32 %v1186, 2147483648
    %v1219 = vxor.u32 %v1187, 2147483648
    %v1220 = vmul.f32 %v1188, 1.442695
    %v1221 = vpow.pop %v1220
    %v1222 = vmul.f32 %v1189, 1.442695
    %v1223 = vpow.pop %v1222
    %v1224 = vmul.f32 %v1190, 1.442695
    %v1225 = vpow.pop %v1224
    %v1226 = vmul.f32 %v1191, 1.442695
    %v1227 = vpow.pop %v1226
    %v1228 = vmul.f32 %v1192, 1.442695
    %v1229 = vpow.pop %v1228
    %v1230 = vmul.f32 %v1193, 1.442695
    %v1231 = vpow.pop %v1230
    %v1232 = vmul.f32 %v1194, 1.442695
    %v1233 = vpow.pop %v1232
    %v1234 = vmul.f32 %v1195, 1.442695
    %v1235 = vpow.pop %v1234
    %v1236 = vmul.f32 %v1196, 1.442695
    %v1237 = vpow.pop %v1236
    %v1238 = vmul.f32 %v1197, 1.442695
    %v1239 = vpow.pop %v1238
    %v1240 = vmul.f32 %v1198, 1.442695
    %v1241 = vpow.pop %v1240
    %v1242 = vmul.f32 %v1199, 1.442695
    %v1243 = vpow.pop %v1242
    %v1244 = vmul.f32 %v1200, 1.442695
    %v1245 = vpow.pop %v1244
    %v1246 = vmul.f32 %v1201, 1.442695
    %v1247 = vpow.pop %v1246
    %v1248 = vmul.f32 %v1202, 1.442695
    %v1249 = vpow.pop %v1248
    %v1250 = vmul.f32 %v1203, 1.442695
    %v1251 = vpow.pop %v1250
    %v1252 = vmul.f32 %v1204, 1.442695
    %v1253 = vpow.pop %v1252
    %v1254 = vmul.f32 %v1205, 1.442695
    %v1255 = vpow.pop %v1254
    %v1256 = vmul.f32 %v1206, 1.442695
    %v1257 = vpow.pop %v1256
    %v1258 = vmul.f32 %v1207, 1.442695
    %v1259 = vpow.pop %v1258
    %v1260 = vmul.f32 %v1208, 1.442695
    %v1261 = vpow.pop %v1260
    %v1262 = vmul.f32 %v1209, 1.442695
    %v1263 = vpow.pop %v1262
    %v1264 = vmul.f32 %v1210, 1.442695
    %v1265 = vpow.pop %v1264
    %v1266 = vmul.f32 %v1211, 1.442695
    %v1267 = vpow.pop %v1266
    %v1268 = vmul.f32 %v1212, 1.442695
    %v1269 = vpow.pop %v1268
    %v1270 = vmul.f32 %v1213, 1.442695
    %v1271 = vpow.pop %v1270
    %v1272 = vmul.f32 %v1214, 1.442695
    %v1273 = vpow.pop %v1272
    %v1274 = vmul.f32 %v1215, 1.442695
    %v1275 = vpow.pop %v1274
    %v1276 = vmul.f32 %v1216, 1.442695
    %v1277 = vpow.pop %v1276
    %v1278 = vmul.f32 %v1217, 1.442695
    %v1279 = vpow.pop %v1278
    %v1280 = vmul.f32 %v1218, 1.442695
    %v1281 = vpow.pop %v1280
    %v1282 = vmul.f32 %v1219, 1.442695
    %v1283 = vpow.pop %v1282
    %v1284 = vadd.f32 %v1221, 1.0
    %v1285 = vadd.f32 %v1223, 1.0
    %v1286 = vadd.f32 %v1225, 1.0
    %v1287 = vadd.f32 %v1227, 1.0
    %v1288 = vadd.f32 %v1229, 1.0
    %v1289 = vadd.f32 %v1231, 1.0
    %v1290 = vadd.f32 %v1233, 1.0
    %v1291 = vadd.f32 %v1235, 1.0
    %v1292 = vadd.f32 %v1237, 1.0
    %v1293 = vadd.f32 %v1239, 1.0
    %v1294 = vadd.f32 %v1241, 1.0
    %v1295 = vadd.f32 %v1243, 1.0
    %v1296 = vadd.f32 %v1245, 1.0
    %v1297 = vadd.f32 %v1247, 1.0
    %v1298 = vadd.f32 %v1249, 1.0
    %v1299 = vadd.f32 %v1251, 1.0
    %v1300 = vadd.f32 %v1253, 1.0
    %v1301 = vadd.f32 %v1255, 1.0
    %v1302 = vadd.f32 %v1257, 1.0
    %v1303 = vadd.f32 %v1259, 1.0
    %v1304 = vadd.f32 %v1261, 1.0
    %v1305 = vadd.f32 %v1263, 1.0
    %v1306 = vadd.f32 %v1265, 1.0
    %v1307 = vadd.f32 %v1267, 1.0
    %v1308 = vadd.f32 %v1269, 1.0
    %v1309 = vadd.f32 %v1271, 1.0
    %v1310 = vadd.f32 %v1273, 1.0
    %v1311 = vadd.f32 %v1275, 1.0
    %v1312 = vadd.f32 %v1277, 1.0
    %v1313 = vadd.f32 %v1279, 1.0
    %v1314 = vadd.f32 %v1281, 1.0
    %v1315 = vadd.f32 %v1283, 1.0
    %v1316 = vrcp.pop %v1284
    %v1317 = vmul.f32 1.0, %v1316
    %v1318 = vrcp.pop %v1285
    %v1319 = vmul.f32 1.0, %v1318
    %v1320 = vrcp.pop %v1286
    %v1321 = vmul.f32 1.0, %v1320
    %v1322 = vrcp.pop %v1287
    %v1323 = vmul.f32 1.0, %v1322
    %v1324 = vrcp.pop %v1288
    %v1325 = vmul.f32 1.0, %v1324
    %v1326 = vrcp.pop %v1289
    %v1327 = vmul.f32 1.0, %v1326
    %v1328 = vrcp.pop %v1290
    %v1329 = vmul.f32 1.0, %v1328
    %v1330 = vrcp.pop %v1291
    %v1331 = vmul.f32 1.0, %v1330
    %v1332 = vrcp.pop %v1292
    %v1333 = vmul.f32 1.0, %v1332
    %v1334 = vrcp.pop %v1293
    %v1335 = vmul.f32 1.0, %v1334
    %v1336 = vrcp.pop %v1294
    %v1337 = vmul.f32 1.0, %v1336
    %v1338 = vrcp.pop %v1295
    %v1339 = vmul.f32 1.0, %v1338
    %v1340 = vrcp.pop %v1296
    %v1341 = vmul.f32 1.0, %v1340
    %v1342 = vrcp.pop %v1297
    %v1343 = vmul.f32 1.0, %v1342
    %v1344 = vrcp.pop %v1298
    %v1345 = vmul.f32 1.0, %v1344
    %v1346 = vrcp.pop %v1299
    %v1347 = vmul.f32 1.0, %v1346
    %v1348 = vrcp.pop %v1300
    %v1349 = vmul.f32 1.0, %v1348
    %v1350 = vrcp.pop %v1301
    %v1351 = vmul.f32 1.0, %v1350
    %v1352 = vrcp.pop %v1302
    %v1353 = vmul.f32 1.0, %v1352
    %v1354 = vrcp.pop %v1303
    %v1355 = vmul.f32 1.0, %v1354
    %v1356 = vrcp.pop %v1304
    %v1357 = vmul.f32 1.0, %v1356
    %v1358 = vrcp.pop %v1305
    %v1359 = vmul.f32 1.0, %v1358
    %v1360 = vrcp.pop %v1306
    %v1361 = vmul.f32 1.0, %v1360
    %v1362 = vrcp.pop %v1307
    %v1363 = vmul.f32 1.0, %v1362
    %v1364 = vrcp.pop %v1308
    %v1365 = vmul.f32 1.0, %v1364
    %v1366 = vrcp.pop %v1309
    %v1367 = vmul.f32 1.0, %v1366
    %v1368 = vrcp.pop %v1310
    %v1369 = vmul.f32 1.0, %v1368
    %v1370 = vrcp.pop %v1311
    %v1371 = vmul.f32 1.0, %v1370
    %v1372 = vrcp.pop %v1312
    %v1373 = vmul.f32 1.0, %v1372
    %v1374 = vrcp.pop %v1313
    %v1375 = vmul.f32 1.0, %v1374
    %v1376 = vrcp.pop %v1314
    %v1377 = vmul.f32 1.0, %v1376
    %v1378 = vrcp.pop %v1315
    %v1379 = vmul.f32 1.0, %v1378
    %vm1380 = vcmask 7168
    %1381 = vst.msk [vmem:[%s5] sm:$0xff] %vm1380, %v1317
    %1382 = vst.msk [vmem:[%s5 + $0x8] sm:$0xff] %vm1380, %v1319
    %1383 = vst.msk [vmem:[%s5 + $0x10] sm:$0xff] %vm1380, %v1321
    %1384 = vst.msk [vmem:[%s5 + $0x18] sm:$0xff] %vm1380, %v1323
    %1385 = vst.msk [vmem:[%s5 + $0x20] sm:$0xff] %vm1380, %v1325
    %1386 = vst.msk [vmem:[%s5 + $0x28] sm:$0xff] %vm1380, %v1327
    %1387 = vst.msk [vmem:[%s5 + $0x30] sm:$0xff] %vm1380, %v1329
    %1388 = vst.msk [vmem:[%s5 + $0x38] sm:$0xff] %vm1380, %v1331
    %1389 = vst.msk [vmem:[%s5 + $0x40] sm:$0xff] %vm1380, %v1333
    %1390 = vst.msk [vmem:[%s5 + $0x48] sm:$0xff] %vm1380, %v1335
    %1391 = vst.msk [vmem:[%s5 + $0x50] sm:$0xff] %vm1380, %v1337
    %1392 = vst.msk [vmem:[%s5 + $0x58] sm:$0xff] %vm1380, %v1339
    %1393 = vst.msk [vmem:[%s5 + $0x60] sm:$0xff] %vm1380, %v1341
    %1394 = vst.msk [vmem:[%s5 + $0x68] sm:$0xff] %vm1380, %v1343
    %1395 = vst.msk [vmem:[%s5 + $0x70] sm:$0xff] %vm1380, %v1345
    %1396 = vst.msk [vmem:[%s5 + $0x78] sm:$0xff] %vm1380, %v1347
    %1397 = vst.msk [vmem:[%s5 + $0x80] sm:$0xff] %vm1380, %v1349
    %1398 = vst.msk [vmem:[%s5 + $0x88] sm:$0xff] %vm1380, %v1351
    %1399 = vst.msk [vmem:[%s5 + $0x90] sm:$0xff] %vm1380, %v1353
    %1400 = vst.msk [vmem:[%s5 + $0x98] sm:$0xff] %vm1380, %v1355
    %1401 = vst.msk [vmem:[%s5 + $0xa0] sm:$0xff] %vm1380, %v1357
    %1402 = vst.msk [vmem:[%s5 + $0xa8] sm:$0xff] %vm1380, %v1359
    %1403 = vst.msk [vmem:[%s5 + $0xb0] sm:$0xff] %vm1380, %v1361
    %1404 = vst.msk [vmem:[%s5 + $0xb8] sm:$0xff] %vm1380, %v1363
    %1405 = vst.msk [vmem:[%s5 + $0xc0] sm:$0xff] %vm1380, %v1365
    %1406 = vst.msk [vmem:[%s5 + $0xc8] sm:$0xff] %vm1380, %v1367
    %1407 = vst.msk [vmem:[%s5 + $0xd0] sm:$0xff] %vm1380, %v1369
    %1408 = vst.msk [vmem:[%s5 + $0xd8] sm:$0xff] %vm1380, %v1371
    %1409 = vst.msk [vmem:[%s5 + $0xe0] sm:$0xff] %vm1380, %v1373
    %1410 = vst.msk [vmem:[%s5 + $0xe8] sm:$0xff] %vm1380, %v1375
    %1411 = vst.msk [vmem:[%s5 + $0xf0] sm:$0xff] %vm1380, %v1377
    %1412 = vst.msk [vmem:[%s5 + $0xf8] sm:$0xff] %vm1380, %v1379
    // Predicated region
    $region30: #{tpu_custom_call.1} parent=1 // pred_check
      _
    $region31: #{tpu_custom_call.1} parent=1 // pred_check_branch
      %1414 = sbr.rel (0) target = $region33
    $region32: #{tpu_custom_call.1} parent=1 // pred_region
      _
    $region33: #{tpu_custom_call.1} parent=1 // pred_fallthru
      _
    // Predicated region
    $region34: #{tpu_custom_call.1} parent=1 // pred_check
      _
    $region35: #{tpu_custom_call.1} parent=1 // pred_check_branch
      %1416 = sbr.rel (0) target = $region37
    $region36: #{tpu_custom_call.1} parent=1 // pred_region
      _
    $region37: #{tpu_custom_call.1} parent=1 // pred_fallthru
      _
    %1417 = vsyncpa [#allocation4], 1
    %1418 = vsyncpa [#allocation6], 1

</llo_original>
